<compile_context>
chip_gen: v6e
topology: v6e:2x2x1
jax: 0.10.0
libtpu: 0.0.40
codegen_flags: <defaults>
</compile_context>

<pallas_src>
import jax
import jax.numpy as jnp
from jax.experimental import pallas as pl
from jax.experimental.pallas import tpu as pltpu


def _make_kernel(n_linear, half, matmul_dtype):
    """Fused coupling kernel for an MLP with `n_linear` Linear layers."""

    def kernel(x_ref, *refs):
        # refs = (W0, b0, W1, b1, ..., W_{L-1}, b_{L-1}, y_ref, logdet_ref)
        w_refs = refs[: 2 * n_linear]
        y_ref, logdet_ref = refs[2 * n_linear :]

        x1 = x_ref[:, :half].astype(jnp.float32)   # (TB, half)
        x2 = x_ref[:, half:].astype(jnp.float32)   # (TB, half)

        # Coupling MLP on x1: ReLU hidden layers, linear output layer.
        h = x1
        for l in range(n_linear):
            w = w_refs[2 * l][...]
            b = w_refs[2 * l + 1][...].astype(jnp.float32)
            lhs = h.astype(matmul_dtype) if matmul_dtype is not None else h
            h = jnp.dot(lhs, w, preferred_element_type=jnp.float32) + b
            if l + 1 < n_linear:
                h = jnp.maximum(h, 0.0)

        logs = jnp.tanh(h[:, :half])   # (TB, half), f32 on EUP
        t = h[:, half:]                # (TB, half)

        y_ref[:, :half] = (x2 * jnp.exp(logs) + t).astype(y_ref.dtype)
        y_ref[:, half:] = x1.astype(y_ref.dtype)
        # Per-row log-det -> each batch tile writes only its own rows (no race
        # on the "parallel" grid axis).
        logdet_ref[...] = jnp.sum(logs, axis=1, keepdims=True).astype(logdet_ref.dtype)

    return kernel


def _round_down8(n):
    return max(8, (n // 8) * 8)


def _vmem_capacity_bytes():
    """Physical VMEM of the local TPU generation (conservative fallback)."""
    try:
        return int(pltpu.get_tpu_info().vmem_capacity_bytes)
    except Exception:
        return 64 * 1024 * 1024   # v7x per-TensorCore (smallest current generation)


def _choose_block_b(B, target=512):
    """Large batch tile (MXU M / DMA size) but >= 4 grid steps when possible."""
    tb = min(B, target)
    if B >= 32:
        # Keep >= 4 grid steps so v7x's two TensorCores both get work and each
        # still pipelines (harmless on single-TC v5e/v6e).
        tb = min(tb, _round_down8(B // 4))
    if tb < B:
        tb = _round_down8(tb)
    return tb


def affine_coupling_forward(x, weights, biases, *, block_b=None, matmul_dtype=None):
    """Pallas equivalent of AffineCoupling1D.forward.

    Args:
      x:            (B, D) float32, D even.
      weights:      MLP weight matrices; weights[0] is (D//2, F), last is (F, D).
      biases:       matching bias vectors.
      block_b:      optional batch-tile override (rounded to a multiple of 8).
      matmul_dtype: optional MXU operand dtype (e.g. jnp.bfloat16) for
                    compute-bound configs on v6e/v7x; elementwise math stays f32.
    Returns:
      (y, logdet): y (B, D) = cat([x2*exp(logs)+t, x1], 1), logdet (B,) = sum(logs, 1).
    """
    B, D = x.shape
    assert D % 2 == 0
    half = D // 2
    n_linear = len(weights)
    assert len(biases) == n_linear
    # TODO(synk): if D//2 is not a multiple of 128 the in-kernel half-splits cross a
    # lane-tile boundary (relayout copies / masked stores); still correct, just slower.

    if matmul_dtype is not None:
        weights = [w.astype(matmul_dtype) for w in weights]
    biases2d = [b.reshape(1, -1).astype(jnp.float32) for b in biases]

    itemsize = jnp.dtype(x.dtype).itemsize
    w_bytes = sum(int(w.size) * jnp.dtype(w.dtype).itemsize for w in weights)
    w_bytes += sum(int(b.size) * 4 for b in biases2d)
    max_width = max(D, max(int(w.shape[1]) for w in weights))

    vmem_cap = _vmem_capacity_bytes()
    vmem_budget = (vmem_cap * 3) // 4   # leave headroom for the compiler

    def footprint(tb, weight_bufs):
        io = 2 * tb * D * itemsize          # one x tile + one y tile
        io += tb * 128 * 4                  # lane-padded logdet tile
        act = 3 * tb * max_width * 4        # live f32 activation slack
        return weight_bufs * w_bytes + 2 * io + act + (2 << 20)

    if block_b is None:
        block_b = _choose_block_b(B)
        # Shrink only if the footprint would exceed the per-generation budget.
        while block_b > 8 and footprint(block_b, 2) > vmem_budget:
            block_b = _round_down8(block_b // 2)
    block_b = min(int(block_b), B)
    if block_b < B:
        block_b = _round_down8(block_b)

    grid = (pl.cdiv(B, block_b),)   # ragged last block is masked by Pallas

    def run(single_buffer_weights):
        in_specs = [pl.BlockSpec((block_b, D), lambda i: (i, 0))]
        args = [x]
        for w, b2 in zip(weights, biases2d):
            if single_buffer_weights:
                # Constant index_map -> fetched once; single buffer halves the
                # resident weight VMEM.
                w_spec = pl.BlockSpec(w.shape, lambda i: (0, 0),
                                      pipeline_mode=pl.Buffered(1))
                b_spec = pl.BlockSpec(b2.shape, lambda i: (0, 0),
                                      pipeline_mode=pl.Buffered(1))
            else:
                w_spec = pl.BlockSpec(w.shape, lambda i: (0, 0))
                b_spec = pl.BlockSpec(b2.shape, lambda i: (0, 0))
            in_specs += [w_spec, b_spec]
            args += [w, b2]

        out_shape = (
            jax.ShapeDtypeStruct((B, D), x.dtype),
            jax.ShapeDtypeStruct((B, 1), jnp.float32),
        )
        out_specs = (
            pl.BlockSpec((block_b, D), lambda i: (i, 0)),
            pl.BlockSpec((block_b, 1), lambda i: (i, 0)),
        )

        weight_bufs = 1 if single_buffer_weights else 2
        vmem_est = footprint(block_b, weight_bufs)
        vmem_limit = max(vmem_est, 16 * 1024 * 1024)
        vmem_limit = min(vmem_limit, vmem_budget)
        # Never clip below the real requirement, never above physical VMEM.
        vmem_limit = min(max(vmem_limit, vmem_est), vmem_cap)

        return pl.pallas_call(
            _make_kernel(n_linear, half, matmul_dtype),
            grid=grid,
            in_specs=in_specs,
            out_specs=out_specs,
            out_shape=out_shape,
            compiler_params=pltpu.CompilerParams(
                dimension_semantics=("parallel",),
                vmem_limit_bytes=int(vmem_limit),
            ),
        )(*args)

    try:
        y, logdet = run(single_buffer_weights=True)
    except Exception:
        # Fallback if this Pallas build rejects pipeline_mode=pl.Buffered(1):
        # default double-buffered weights are still correct, just use more VMEM.
        y, logdet = run(single_buffer_weights=False)

    return y, logdet[:, 0]


if __name__ == "__main__":
    key = jax.random.PRNGKey(0)

    # Lane-aligned small shapes: input_dim=256 -> x1/x2 are 128 wide (one lane
    # tile); features=128; 2 hidden layers. batch=512 so the auto tile picker
    # lands on block_b=128 and a 4-step pipelined grid (2 steps per TC on v7x).
    B, input_dim, features, hidden_layers = 512, 256, 128, 2
    half = input_dim // 2

    layer_dims = (
        [(half, features)]
        + [(features, features)] * (hidden_layers - 1)
        + [(features, input_dim)]
    )

    keys = jax.random.split(key, 2 * len(layer_dims) + 1)
    x = jax.random.normal(keys[0], (B, input_dim), dtype=jnp.float32)

    weights, biases = [], []
    for li, (din, dout) in enumerate(layer_dims):
        weights.append(0.1 * jax.random.normal(keys[1 + 2 * li], (din, dout), jnp.float32))
        biases.append(0.01 * jax.random.normal(keys[2 + 2 * li], (dout,), jnp.float32))
    # NOTE: the module's zero_init=True zeroes the last Linear at init time
    # (making logs=t=0); we use non-zero weights so the kernel math is
    # exercised non-trivially. Forward semantics are unchanged.

    y, logdet = affine_coupling_forward(x, weights, biases)
    y = jax.block_until_ready(y)
    logdet = jax.block_until_ready(logdet)

    # Pure-JAX reference.
    x1, x2 = x[:, :half], x[:, half:]
    h = x1
    for li, (w, b) in enumerate(zip(weights, biases)):
        h = jnp.dot(h, w, precision=jax.lax.Precision.HIGHEST) + b
        if li + 1 < len(weights):
            h = jnp.maximum(h, 0.0)
    logs_ref = jnp.tanh(h[:, :half])
    t_ref = h[:, half:]
    y_ref = jnp.concatenate([x2 * jnp.exp(logs_ref) + t_ref, x1], axis=1)
    logdet_ref = jnp.sum(logs_ref, axis=1)

    assert jnp.allclose(y, y_ref, atol=5e-4, rtol=5e-4), float(jnp.max(jnp.abs(y - y_ref)))
    assert jnp.allclose(logdet, logdet_ref, atol=5e-4, rtol=5e-4)

    print("KERNEL_OK")
</pallas_src>

<mosaic_0001>
module attributes {stable_mosaic.version = 11 : i64} {
  func.func @kernel(%arg0: i32, %arg1: memref<128x256xf32, #tpu.memory_space<vmem>>, %arg2: memref<128x128xf32, #tpu.memory_space<vmem>>, %arg3: memref<1x128xf32, #tpu.memory_space<vmem>>, %arg4: memref<128x128xf32, #tpu.memory_space<vmem>>, %arg5: memref<1x128xf32, #tpu.memory_space<vmem>>, %arg6: memref<128x256xf32, #tpu.memory_space<vmem>>, %arg7: memref<1x256xf32, #tpu.memory_space<vmem>>, %arg8: memref<128x256xf32, #tpu.memory_space<vmem>>, %arg9: memref<128x1xf32, #tpu.memory_space<vmem>>) attributes {dimension_semantics = [#tpu.dimension_semantics<parallel>], iteration_bounds = array<i64: 4>, scalar_prefetch = 0 : i64, scratch_operands = 0 : i64, tpu.core_type = #tpu.core_type<tc>, window_params = [{transform_indices = @transform_0, window_bounds = array<i64: 128, 256>}, {pipeline_mode = #tpu.pipeline_mode<synchronous>, transform_indices = @transform_1, window_bounds = array<i64: 128, 128>}, {pipeline_mode = #tpu.pipeline_mode<synchronous>, transform_indices = @transform_2, window_bounds = array<i64: 1, 128>}, {pipeline_mode = #tpu.pipeline_mode<synchronous>, transform_indices = @transform_3, window_bounds = array<i64: 128, 128>}, {pipeline_mode = #tpu.pipeline_mode<synchronous>, transform_indices = @transform_4, window_bounds = array<i64: 1, 128>}, {pipeline_mode = #tpu.pipeline_mode<synchronous>, transform_indices = @transform_5, window_bounds = array<i64: 128, 256>}, {pipeline_mode = #tpu.pipeline_mode<synchronous>, transform_indices = @transform_6, window_bounds = array<i64: 1, 256>}, {transform_indices = @transform_7, window_bounds = array<i64: 128, 256>}, {transform_indices = @transform_8, window_bounds = array<i64: 128, 1>}]} {
    %c0 = arith.constant 0 : index
    %c0_0 = arith.constant 0 : index
    %0 = vector.load %arg1[%c0, %c0_0] : memref<128x256xf32, #tpu.memory_space<vmem>>, vector<128x128xf32>
    %c0_1 = arith.constant 0 : index
    %c128 = arith.constant 128 : index
    %1 = vector.load %arg1[%c0_1, %c128] : memref<128x256xf32, #tpu.memory_space<vmem>>, vector<128x128xf32>
    %c0_2 = arith.constant 0 : index
    %c0_3 = arith.constant 0 : index
    %2 = vector.load %arg2[%c0_2, %c0_3] : memref<128x128xf32, #tpu.memory_space<vmem>>, vector<128x128xf32>
    %c0_4 = arith.constant 0 : index
    %c0_5 = arith.constant 0 : index
    %3 = vector.load %arg3[%c0_4, %c0_5] : memref<1x128xf32, #tpu.memory_space<vmem>>, vector<1x128xf32>
    %cst = arith.constant dense<0.000000e+00> : vector<128x128xf32>
    %4 = tpu.matmul %0, %2, %cst {dimension_numbers = #tpu.dot_dimension_numbers<[1], [0], [0], [1], [0, 0, 1, 1], [], []>} : vector<128x128xf32>, vector<128x128xf32>, vector<128x128xf32> -> vector<128x128xf32>
    %5 = vector.broadcast %3 : vector<1x128xf32> to vector<128x128xf32>
    %6 = arith.addf %4, %5 : vector<128x128xf32>
    %cst_6 = arith.constant 0.000000e+00 : f32
    %7 = vector.broadcast %cst_6 : f32 to vector<128x128xf32>
    %8 = arith.maximumf %6, %7 : vector<128x128xf32>
    %c0_7 = arith.constant 0 : index
    %c0_8 = arith.constant 0 : index
    %9 = vector.load %arg4[%c0_7, %c0_8] : memref<128x128xf32, #tpu.memory_space<vmem>>, vector<128x128xf32>
    %c0_9 = arith.constant 0 : index
    %c0_10 = arith.constant 0 : index
    %10 = vector.load %arg5[%c0_9, %c0_10] : memref<1x128xf32, #tpu.memory_space<vmem>>, vector<1x128xf32>
    %cst_11 = arith.constant dense<0.000000e+00> : vector<128x128xf32>
    %11 = tpu.matmul %8, %9, %cst_11 {dimension_numbers = #tpu.dot_dimension_numbers<[1], [0], [0], [1], [0, 0, 1, 1], [], []>} : vector<128x128xf32>, vector<128x128xf32>, vector<128x128xf32> -> vector<128x128xf32>
    %12 = vector.broadcast %10 : vector<1x128xf32> to vector<128x128xf32>
    %13 = arith.addf %11, %12 : vector<128x128xf32>
    %cst_12 = arith.constant 0.000000e+00 : f32
    %14 = vector.broadcast %cst_12 : f32 to vector<128x128xf32>
    %15 = arith.maximumf %13, %14 : vector<128x128xf32>
    %c0_13 = arith.constant 0 : index
    %c0_14 = arith.constant 0 : index
    %16 = vector.load %arg6[%c0_13, %c0_14] : memref<128x256xf32, #tpu.memory_space<vmem>>, vector<128x256xf32>
    %c0_15 = arith.constant 0 : index
    %c0_16 = arith.constant 0 : index
    %17 = vector.load %arg7[%c0_15, %c0_16] : memref<1x256xf32, #tpu.memory_space<vmem>>, vector<1x256xf32>
    %cst_17 = arith.constant dense<0.000000e+00> : vector<128x256xf32>
    %18 = tpu.matmul %15, %16, %cst_17 {dimension_numbers = #tpu.dot_dimension_numbers<[1], [0], [0], [1], [0, 0, 1, 1], [], []>} : vector<128x128xf32>, vector<128x256xf32>, vector<128x256xf32> -> vector<128x256xf32>
    %19 = vector.broadcast %17 : vector<1x256xf32> to vector<128x256xf32>
    %20 = arith.addf %18, %19 : vector<128x256xf32>
    %21 = vector.extract_strided_slice %20 {offsets = [0, 0], sizes = [128, 128], strides = [1, 1]} : vector<128x256xf32> to vector<128x128xf32>
    %22 = math.tanh %21 : vector<128x128xf32>
    %23 = vector.extract_strided_slice %20 {offsets = [0, 128], sizes = [128, 128], strides = [1, 1]} : vector<128x256xf32> to vector<128x128xf32>
    %24 = math.exp %22 : vector<128x128xf32>
    %25 = arith.mulf %1, %24 : vector<128x128xf32>
    %26 = arith.addf %25, %23 : vector<128x128xf32>
    %c0_18 = arith.constant 0 : index
    %c0_19 = arith.constant 0 : index
    %27 = vector.load %arg8[%c0_18, %c0_19] : memref<128x256xf32, #tpu.memory_space<vmem>>, vector<128x128xf32>
    tpu.vector_store %arg8[%c0_18, %c0_19], %26 {strides = array<i32>} : memref<128x256xf32, #tpu.memory_space<vmem>>, vector<128x128xf32>,
    %c0_20 = arith.constant 0 : index
    %c128_21 = arith.constant 128 : index
    %28 = vector.load %arg8[%c0_20, %c128_21] : memref<128x256xf32, #tpu.memory_space<vmem>>, vector<128x128xf32>
    tpu.vector_store %arg8[%c0_20, %c128_21], %0 {strides = array<i32>} : memref<128x256xf32, #tpu.memory_space<vmem>>, vector<128x128xf32>,
    %cst_22 = arith.constant dense<0.000000e+00> : vector<128xf32>
    %29 = vector.multi_reduction <add>, %22, %cst_22 [1] : vector<128x128xf32> to vector<128xf32>
    %30 = vector.shape_cast %29 : vector<128xf32> to vector<128x1xf32>
    %c0_23 = arith.constant 0 : index
    %c0_24 = arith.constant 0 : index
    %31 = vector.load %arg9[%c0_23, %c0_24] : memref<128x1xf32, #tpu.memory_space<vmem>>, vector<128x1xf32>
    tpu.vector_store %arg9[%c0_23, %c0_24], %30 {strides = array<i32>} : memref<128x1xf32, #tpu.memory_space<vmem>>, vector<128x1xf32>,
    return
  }
  func.func @transform_0(%arg0: i32) -> (i32, i32) {
    %c0_i32 = arith.constant 0 : i32
    %c0_i32_0 = arith.constant 0 : i32
    return %arg0, %c0_i32 : i32, i32
  }
  func.func @transform_1(%arg0: i32) -> (i32, i32) {
    %c0_i32 = arith.constant 0 : i32
    %c0_i32_0 = arith.constant 0 : i32
    %c0_i32_1 = arith.constant 0 : i32
    return %c0_i32, %c0_i32_0 : i32, i32
  }
  func.func @transform_2(%arg0: i32) -> (i32, i32) {
    %c0_i32 = arith.constant 0 : i32
    %c0_i32_0 = arith.constant 0 : i32
    %c0_i32_1 = arith.constant 0 : i32
    return %c0_i32, %c0_i32_0 : i32, i32
  }
  func.func @transform_3(%arg0: i32) -> (i32, i32) {
    %c0_i32 = arith.constant 0 : i32
    %c0_i32_0 = arith.constant 0 : i32
    %c0_i32_1 = arith.constant 0 : i32
    return %c0_i32, %c0_i32_0 : i32, i32
  }
  func.func @transform_4(%arg0: i32) -> (i32, i32) {
    %c0_i32 = arith.constant 0 : i32
    %c0_i32_0 = arith.constant 0 : i32
    %c0_i32_1 = arith.constant 0 : i32
    return %c0_i32, %c0_i32_0 : i32, i32
  }
  func.func @transform_5(%arg0: i32) -> (i32, i32) {
    %c0_i32 = arith.constant 0 : i32
    %c0_i32_0 = arith.constant 0 : i32
    %c0_i32_1 = arith.constant 0 : i32
    return %c0_i32, %c0_i32_0 : i32, i32
  }
  func.func @transform_6(%arg0: i32) -> (i32, i32) {
    %c0_i32 = arith.constant 0 : i32
    %c0_i32_0 = arith.constant 0 : i32
    %c0_i32_1 = arith.constant 0 : i32
    return %c0_i32, %c0_i32_0 : i32, i32
  }
  func.func @transform_7(%arg0: i32) -> (i32, i32) {
    %c0_i32 = arith.constant 0 : i32
    %c0_i32_0 = arith.constant 0 : i32
    return %arg0, %c0_i32 : i32, i32
  }
  func.func @transform_8(%arg0: i32) -> (i32, i32) {
    %c0_i32 = arith.constant 0 : i32
    %c0_i32_0 = arith.constant 0 : i32
    return %arg0, %c0_i32 : i32, i32
  }
}

module attributes {stable_mosaic.version = 11 : i64} {
  func.func @kernel(%arg0: i32, %arg1: memref<128x256xf32, #tpu.memory_space<vmem>>, %arg2: memref<128x128xf32, #tpu.memory_space<vmem>>, %arg3: memref<1x128xf32, #tpu.memory_space<vmem>>, %arg4: memref<128x128xf32, #tpu.memory_space<vmem>>, %arg5: memref<1x128xf32, #tpu.memory_space<vmem>>, %arg6: memref<128x256xf32, #tpu.memory_space<vmem>>, %arg7: memref<1x256xf32, #tpu.memory_space<vmem>>, %arg8: memref<128x256xf32, #tpu.memory_space<vmem>>, %arg9: memref<128x1xf32, #tpu.memory_space<vmem>>) attributes {dimension_semantics = [#tpu.dimension_semantics<parallel>], iteration_bounds = array<i64: 4>, scalar_prefetch = 0 : i64, scratch_operands = 0 : i64, tpu.core_type = #tpu.core_type<tc>, window_params = [{transform_indices = @transform_0, window_bounds = array<i64: 128, 256>}, {pipeline_mode = #tpu.pipeline_mode<synchronous>, transform_indices = @transform_1, window_bounds = array<i64: 128, 128>}, {pipeline_mode = #tpu.pipeline_mode<synchronous>, transform_indices = @transform_2, window_bounds = array<i64: 1, 128>}, {pipeline_mode = #tpu.pipeline_mode<synchronous>, transform_indices = @transform_3, window_bounds = array<i64: 128, 128>}, {pipeline_mode = #tpu.pipeline_mode<synchronous>, transform_indices = @transform_4, window_bounds = array<i64: 1, 128>}, {pipeline_mode = #tpu.pipeline_mode<synchronous>, transform_indices = @transform_5, window_bounds = array<i64: 128, 256>}, {pipeline_mode = #tpu.pipeline_mode<synchronous>, transform_indices = @transform_6, window_bounds = array<i64: 1, 256>}, {transform_indices = @transform_7, window_bounds = array<i64: 128, 256>}, {transform_indices = @transform_8, window_bounds = array<i64: 128, 1>}]} {
    %c0 = arith.constant 0 : index
    %c0_0 = arith.constant 0 : index
    %0 = vector.load %arg1[%c0, %c0_0] : memref<128x256xf32, #tpu.memory_space<vmem>>, vector<128x128xf32>
    %c0_1 = arith.constant 0 : index
    %c128 = arith.constant 128 : index
    %1 = vector.load %arg1[%c0_1, %c128] : memref<128x256xf32, #tpu.memory_space<vmem>>, vector<128x128xf32>
    %c0_2 = arith.constant 0 : index
    %c0_3 = arith.constant 0 : index
    %2 = vector.load %arg2[%c0_2, %c0_3] : memref<128x128xf32, #tpu.memory_space<vmem>>, vector<128x128xf32>
    %c0_4 = arith.constant 0 : index
    %c0_5 = arith.constant 0 : index
    %3 = vector.load %arg3[%c0_4, %c0_5] : memref<1x128xf32, #tpu.memory_space<vmem>>, vector<1x128xf32>
    %cst = arith.constant dense<0.000000e+00> : vector<128x128xf32>
    %4 = tpu.matmul %0, %2, %cst {dimension_numbers = #tpu.dot_dimension_numbers<[1], [0], [0], [1], [0, 0, 1, 1], [], []>} : vector<128x128xf32>, vector<128x128xf32>, vector<128x128xf32> -> vector<128x128xf32>
    %5 = vector.broadcast %3 : vector<1x128xf32> to vector<128x128xf32>
    %6 = arith.addf %4, %5 : vector<128x128xf32>
    %cst_6 = arith.constant 0.000000e+00 : f32
    %7 = vector.broadcast %cst_6 : f32 to vector<128x128xf32>
    %8 = arith.maximumf %6, %7 : vector<128x128xf32>
    %c0_7 = arith.constant 0 : index
    %c0_8 = arith.constant 0 : index
    %9 = vector.load %arg4[%c0_7, %c0_8] : memref<128x128xf32, #tpu.memory_space<vmem>>, vector<128x128xf32>
    %c0_9 = arith.constant 0 : index
    %c0_10 = arith.constant 0 : index
    %10 = vector.load %arg5[%c0_9, %c0_10] : memref<1x128xf32, #tpu.memory_space<vmem>>, vector<1x128xf32>
    %cst_11 = arith.constant dense<0.000000e+00> : vector<128x128xf32>
    %11 = tpu.matmul %8, %9, %cst_11 {dimension_numbers = #tpu.dot_dimension_numbers<[1], [0], [0], [1], [0, 0, 1, 1], [], []>} : vector<128x128xf32>, vector<128x128xf32>, vector<128x128xf32> -> vector<128x128xf32>
    %12 = vector.broadcast %10 : vector<1x128xf32> to vector<128x128xf32>
    %13 = arith.addf %11, %12 : vector<128x128xf32>
    %cst_12 = arith.constant 0.000000e+00 : f32
    %14 = vector.broadcast %cst_12 : f32 to vector<128x128xf32>
    %15 = arith.maximumf %13, %14 : vector<128x128xf32>
    %c0_13 = arith.constant 0 : index
    %c0_14 = arith.constant 0 : index
    %16 = vector.load %arg6[%c0_13, %c0_14] : memref<128x256xf32, #tpu.memory_space<vmem>>, vector<128x256xf32>
    %c0_15 = arith.constant 0 : index
    %c0_16 = arith.constant 0 : index
    %17 = vector.load %arg7[%c0_15, %c0_16] : memref<1x256xf32, #tpu.memory_space<vmem>>, vector<1x256xf32>
    %cst_17 = arith.constant dense<0.000000e+00> : vector<128x256xf32>
    %18 = tpu.matmul %15, %16, %cst_17 {dimension_numbers = #tpu.dot_dimension_numbers<[1], [0], [0], [1], [0, 0, 1, 1], [], []>} : vector<128x128xf32>, vector<128x256xf32>, vector<128x256xf32> -> vector<128x256xf32>
    %19 = vector.broadcast %17 : vector<1x256xf32> to vector<128x256xf32>
    %20 = arith.addf %18, %19 : vector<128x256xf32>
    %21 = vector.extract_strided_slice %20 {offsets = [0, 0], sizes = [128, 128], strides = [1, 1]} : vector<128x256xf32> to vector<128x128xf32>
    %22 = math.tanh %21 : vector<128x128xf32>
    %23 = vector.extract_strided_slice %20 {offsets = [0, 128], sizes = [128, 128], strides = [1, 1]} : vector<128x256xf32> to vector<128x128xf32>
    %24 = math.exp %22 : vector<128x128xf32>
    %25 = arith.mulf %1, %24 : vector<128x128xf32>
    %26 = arith.addf %25, %23 : vector<128x128xf32>
    %c0_18 = arith.constant 0 : index
    %c0_19 = arith.constant 0 : index
    %27 = vector.load %arg8[%c0_18, %c0_19] : memref<128x256xf32, #tpu.memory_space<vmem>>, vector<128x128xf32>
    tpu.vector_store %arg8[%c0_18, %c0_19], %26 {strides = array<i32>} : memref<128x256xf32, #tpu.memory_space<vmem>>, vector<128x128xf32>,
    %c0_20 = arith.constant 0 : index
    %c128_21 = arith.constant 128 : index
    %28 = vector.load %arg8[%c0_20, %c128_21] : memref<128x256xf32, #tpu.memory_space<vmem>>, vector<128x128xf32>
    tpu.vector_store %arg8[%c0_20, %c128_21], %0 {strides = array<i32>} : memref<128x256xf32, #tpu.memory_space<vmem>>, vector<128x128xf32>,
    %cst_22 = arith.constant dense<0.000000e+00> : vector<128xf32>
    %29 = vector.multi_reduction <add>, %22, %cst_22 [1] : vector<128x128xf32> to vector<128xf32>
    %30 = vector.shape_cast %29 : vector<128xf32> to vector<128x1xf32>
    %c0_23 = arith.constant 0 : index
    %c0_24 = arith.constant 0 : index
    %31 = vector.load %arg9[%c0_23, %c0_24] : memref<128x1xf32, #tpu.memory_space<vmem>>, vector<128x1xf32>
    tpu.vector_store %arg9[%c0_23, %c0_24], %30 {strides = array<i32>} : memref<128x1xf32, #tpu.memory_space<vmem>>, vector<128x1xf32>,
    return
  }
  func.func @transform_0(%arg0: i32) -> (i32, i32) {
    %c0_i32 = arith.constant 0 : i32
    %c0_i32_0 = arith.constant 0 : i32
    return %arg0, %c0_i32 : i32, i32
  }
  func.func @transform_1(%arg0: i32) -> (i32, i32) {
    %c0_i32 = arith.constant 0 : i32
    %c0_i32_0 = arith.constant 0 : i32
    %c0_i32_1 = arith.constant 0 : i32
    return %c0_i32, %c0_i32_0 : i32, i32
  }
  func.func @transform_2(%arg0: i32) -> (i32, i32) {
    %c0_i32 = arith.constant 0 : i32
    %c0_i32_0 = arith.constant 0 : i32
    %c0_i32_1 = arith.constant 0 : i32
    return %c0_i32, %c0_i32_0 : i32, i32
  }
  func.func @transform_3(%arg0: i32) -> (i32, i32) {
    %c0_i32 = arith.constant 0 : i32
    %c0_i32_0 = arith.constant 0 : i32
    %c0_i32_1 = arith.constant 0 : i32
    return %c0_i32, %c0_i32_0 : i32, i32
  }
  func.func @transform_4(%arg0: i32) -> (i32, i32) {
    %c0_i32 = arith.constant 0 : i32
    %c0_i32_0 = arith.constant 0 : i32
    %c0_i32_1 = arith.constant 0 : i32
    return %c0_i32, %c0_i32_0 : i32, i32
  }
  func.func @transform_5(%arg0: i32) -> (i32, i32) {
    %c0_i32 = arith.constant 0 : i32
    %c0_i32_0 = arith.constant 0 : i32
    %c0_i32_1 = arith.constant 0 : i32
    return %c0_i32, %c0_i32_0 : i32, i32
  }
  func.func @transform_6(%arg0: i32) -> (i32, i32) {
    %c0_i32 = arith.constant 0 : i32
    %c0_i32_0 = arith.constant 0 : i32
    %c0_i32_1 = arith.constant 0 : i32
    return %c0_i32, %c0_i32_0 : i32, i32
  }
  func.func @transform_7(%arg0: i32) -> (i32, i32) {
    %c0_i32 = arith.constant 0 : i32
    %c0_i32_0 = arith.constant 0 : i32
    return %arg0, %c0_i32 : i32, i32
  }
  func.func @transform_8(%arg0: i32) -> (i32, i32) {
    %c0_i32 = arith.constant 0 : i32
    %c0_i32_0 = arith.constant 0 : i32
    return %arg0, %c0_i32 : i32, i32
  }
}

</mosaic_0001>

<llo_original>
// kernel: tpu_custom_call.1
$region0: #{tpu_custom_call.1}
  #allocation0 [shape = 'u32[]', space=smem, size = 0x4, offset = 0x4, fixed_abs, tag = 'smem constant byte address 0x4 - core index']
  #allocation1 [shape = 'u32[144,128]{1,0:T(1,128)}', space=vmem, size = 0x12000, scoped, tag = 'internal scratch']
  %s0 = inlined_call_operand.hbm [shape: f32[512,256], index: 0, kind: input, shape index: {}]
  %s1 = inlined_call_operand.hbm [shape: f32[128,128], index: 1, kind: input, shape index: {}]
  %s2 = inlined_call_operand.vmem [shape: f32[1,128], index: 2, kind: input, shape index: {}]
  %s3 = inlined_call_operand.hbm [shape: f32[128,128], index: 3, kind: input, shape index: {}]
  %s4 = inlined_call_operand.vmem [shape: f32[1,128], index: 4, kind: input, shape index: {}]
  %s5 = inlined_call_operand.hbm [shape: f32[128,256], index: 5, kind: input, shape index: {}]
  %s6 = inlined_call_operand.vmem [shape: f32[1,256], index: 6, kind: input, shape index: {}]
  %s7 = inlined_call_operand.hbm [shape: f32[512,256], index: 7, kind: output, shape index: {0}]
  %s8 = inlined_call_operand.vmem [shape: f32[512,1], index: 8, kind: output, shape index: {1}]
  %9 = xla_tuple %s7, %s8
  %s10 = sld [smem:[#allocation0]]
  $region85: #{tpu_custom_call.1} parent=0
    _
  %s12 = ssub.s32 1, %s10
  %s13 = scalar_select 0, %s12, %s10
  $region1: #{tpu_custom_call.1} parent=0
    #allocation2 [shape = 'u8[262144]{0}', space=vmem, size = 0x40000, scoped, tag = 'input window, operand 0']
    #allocation3 [shape = 's32[2]{0}', space=sflag, size = 0x8, scoped, tag = 'scoped memory for tpu_custom_call.1']
    #allocation4 [shape = 's32[2]{0}', space=sflag, size = 0x8, scoped, tag = 'scoped memory for tpu_custom_call.1']
    #allocation5 [shape = 'u8[65536]{0}', space=vmem, size = 0x10000, scoped, tag = 'input window, operand 1, single buffered']
    #allocation6 [shape = 's32[1]{0}', space=sflag, size = 0x4, scoped, tag = 'scoped memory for tpu_custom_call.1']
    #allocation7 [shape = 'u8[65536]{0}', space=vmem, size = 0x10000, scoped, tag = 'input window, operand 3, single buffered']
    #allocation8 [shape = 'u8[131072]{0}', space=vmem, size = 0x20000, scoped, tag = 'input window, operand 5, single buffered']
    #allocation9 [shape = 's32[1]{0}', space=sflag, size = 0x4, scoped, tag = 'scoped memory for tpu_custom_call.1']
    #allocation10 [shape = 'u8[262144]{0}', space=vmem, size = 0x40000, scoped, tag = 'output window, operand 0']
    %14 = vsyncpa [#allocation3], 0
    %s15 = scalar_lea.sflag [#allocation3], 1
    %16 = vsyncpa %s15, 0
    %17 = vsyncpa [#allocation6], 0
    %18 = vsyncpa [#allocation9], 0
    %19 = vsyncpa [#allocation4], 0
    %s20 = scalar_lea.sflag [#allocation4], 1
    %21 = vsyncpa %s20, 0
    loop: start=0, step=1, limit=6
    $region2: #{tpu_custom_call.1} parent=1 // loop_pre_header
      _
    $region3: #{tpu_custom_call.1} parent=1 // loop_header
      %s23 = sphi 0, %s27
      %p24 = scmp.ge.s32.totalorder %s23, 6
      %s33 = sphi 0, %s35
      %s36 = sphi 0, %s33
      %s37 = sphi 0, %s36
      %s53 = sphi 0, %s37
      %s57 = sphi 0, %s57
      %s59 = sphi 0, %s57
      %s60 = sphi 0, %s59
      %s74 = sphi 0, %s60
      %s78 = sphi 0, %s78
      %s80 = sphi 0, %s78
      %s81 = sphi 0, %s80
      %s95 = sphi 0, %s81
      %s99 = sphi 0, %s99
      %s101 = sphi 0, %s99
      %s102 = sphi 0, %s101
      %s116 = sphi 0, %s102
      %s120 = sphi 0, %s120
      %s122 = sphi 0, %s120
      %s123 = sphi 0, %s122
      %s137 = sphi 0, %s123
      %s141 = sphi 0, %s141
      %s143 = sphi 0, %s141
      %s144 = sphi 0, %s143
      %s158 = sphi 0, %s144
      %s162 = sphi 0, %s162
      %s164 = sphi 0, %s162
      %s165 = sphi 0, %s164
      %s179 = sphi 0, %s165
      %s185 = sphi 0, %s187
      %s188 = sphi 0, %s185
      %s189 = sphi 0, %s188
      %s205 = sphi 0, %s189
      %s211 = sphi 0, %s213
      %s214 = sphi 0, %s211
      %s215 = sphi 0, %s214
      %s231 = sphi 0, %s215
    $region4: #{tpu_custom_call.1} parent=1 // loop_header_branch
      %26 = sbr.rel (%p24) target = $region8
    $region5: #{tpu_custom_call.1} parent=1 // loop_body
      %s28 = ssub.s32 %s23, 1
      %s29 = ssub.s32 %s23, 2
      %s30 = sadd.s32 %s23, 1
      %s31 = ssub.s32 %s23, %s30
      %p32 = scmp.eq.s32.totalorder %s31, 0
      %s34 = sadd.s32 %s33, 1
      %s35 = scalar_select %p32, %s33, %s34
      %p38 = pneg %p32
      %p39 = scmp.eq.s32.totalorder %s23, 3
      %p40 = por %p38, %p39
      %p41 = scmp.ne.s32.totalorder %s33, %s36
      %p42 = scmp.eq.s32.totalorder %s23, 0
      %p43 = por %p41, %p42
      %p44 = scmp.ne.s32.totalorder %s33, %s36
      %p45 = scmp.eq.s32.totalorder %s28, 3
      %p46 = por %p44, %p45
      %p47 = scmp.ne.s32.totalorder %s36, %s37
      %p48 = scmp.eq.s32.totalorder %s28, 0
      %p49 = por %p47, %p48
      %p50 = scmp.ne.s32.totalorder %s36, %s37
      %p51 = scmp.eq.s32.totalorder %s29, 3
      %p52 = por %p50, %p51
      %p54 = scmp.ne.s32.totalorder %s37, %s53
      %p55 = scmp.eq.s32.totalorder %s29, 0
      %p56 = por %p54, %p55
      %s58 = sadd.s32 %s57, 1
      %p61 = scmp.eq.s32.totalorder %s23, 3
      %p62 = scmp.ne.s32.totalorder %s57, %s59
      %p63 = scmp.eq.s32.totalorder %s23, 0
      %p64 = por %p62, %p63
      %p65 = scmp.ne.s32.totalorder %s57, %s59
      %p66 = scmp.eq.s32.totalorder %s28, 3
      %p67 = por %p65, %p66
      %p68 = scmp.ne.s32.totalorder %s59, %s60
      %p69 = scmp.eq.s32.totalorder %s28, 0
      %p70 = por %p68, %p69
      %p71 = scmp.ne.s32.totalorder %s59, %s60
      %p72 = scmp.eq.s32.totalorder %s29, 3
      %p73 = por %p71, %p72
      %p75 = scmp.ne.s32.totalorder %s60, %s74
      %p76 = scmp.eq.s32.totalorder %s29, 0
      %p77 = por %p75, %p76
      %s79 = sadd.s32 %s78, 1
      %p82 = scmp.eq.s32.totalorder %s23, 3
      %p83 = scmp.ne.s32.totalorder %s78, %s80
      %p84 = scmp.eq.s32.totalorder %s23, 0
      %p85 = por %p83, %p84
      %p86 = scmp.ne.s32.totalorder %s78, %s80
      %p87 = scmp.eq.s32.totalorder %s28, 3
      %p88 = por %p86, %p87
      %p89 = scmp.ne.s32.totalorder %s80, %s81
      %p90 = scmp.eq.s32.totalorder %s28, 0
      %p91 = por %p89, %p90
      %p92 = scmp.ne.s32.totalorder %s80, %s81
      %p93 = scmp.eq.s32.totalorder %s29, 3
      %p94 = por %p92, %p93
      %p96 = scmp.ne.s32.totalorder %s81, %s95
      %p97 = scmp.eq.s32.totalorder %s29, 0
      %p98 = por %p96, %p97
      %s100 = sadd.s32 %s99, 1
      %p103 = scmp.eq.s32.totalorder %s23, 3
      %p104 = scmp.ne.s32.totalorder %s99, %s101
      %p105 = scmp.eq.s32.totalorder %s23, 0
      %p106 = por %p104, %p105
      %p107 = scmp.ne.s32.totalorder %s99, %s101
      %p108 = scmp.eq.s32.totalorder %s28, 3
      %p109 = por %p107, %p108
      %p110 = scmp.ne.s32.totalorder %s101, %s102
      %p111 = scmp.eq.s32.totalorder %s28, 0
      %p112 = por %p110, %p111
      %p113 = scmp.ne.s32.totalorder %s101, %s102
      %p114 = scmp.eq.s32.totalorder %s29, 3
      %p115 = por %p113, %p114
      %p117 = scmp.ne.s32.totalorder %s102, %s116
      %p118 = scmp.eq.s32.totalorder %s29, 0
      %p119 = por %p117, %p118
      %s121 = sadd.s32 %s120, 1
      %p124 = scmp.eq.s32.totalorder %s23, 3
      %p125 = scmp.ne.s32.totalorder %s120, %s122
      %p126 = scmp.eq.s32.totalorder %s23, 0
      %p127 = por %p125, %p126
      %p128 = scmp.ne.s32.totalorder %s120, %s122
      %p129 = scmp.eq.s32.totalorder %s28, 3
      %p130 = por %p128, %p129
      %p131 = scmp.ne.s32.totalorder %s122, %s123
      %p132 = scmp.eq.s32.totalorder %s28, 0
      %p133 = por %p131, %p132
      %p134 = scmp.ne.s32.totalorder %s122, %s123
      %p135 = scmp.eq.s32.totalorder %s29, 3
      %p136 = por %p134, %p135
      %p138 = scmp.ne.s32.totalorder %s123, %s137
      %p139 = scmp.eq.s32.totalorder %s29, 0
      %p140 = por %p138, %p139
      %s142 = sadd.s32 %s141, 1
      %p145 = scmp.eq.s32.totalorder %s23, 3
      %p146 = scmp.ne.s32.totalorder %s141, %s143
      %p147 = scmp.eq.s32.totalorder %s23, 0
      %p148 = por %p146, %p147
      %p149 = scmp.ne.s32.totalorder %s141, %s143
      %p150 = scmp.eq.s32.totalorder %s28, 3
      %p151 = por %p149, %p150
      %p152 = scmp.ne.s32.totalorder %s143, %s144
      %p153 = scmp.eq.s32.totalorder %s28, 0
      %p154 = por %p152, %p153
      %p155 = scmp.ne.s32.totalorder %s143, %s144
      %p156 = scmp.eq.s32.totalorder %s29, 3
      %p157 = por %p155, %p156
      %p159 = scmp.ne.s32.totalorder %s144, %s158
      %p160 = scmp.eq.s32.totalorder %s29, 0
      %p161 = por %p159, %p160
      %s163 = sadd.s32 %s162, 1
      %p166 = scmp.eq.s32.totalorder %s23, 3
      %p167 = scmp.ne.s32.totalorder %s162, %s164
      %p168 = scmp.eq.s32.totalorder %s23, 0
      %p169 = por %p167, %p168
      %p170 = scmp.ne.s32.totalorder %s162, %s164
      %p171 = scmp.eq.s32.totalorder %s28, 3
      %p172 = por %p170, %p171
      %p173 = scmp.ne.s32.totalorder %s164, %s165
      %p174 = scmp.eq.s32.totalorder %s28, 0
      %p175 = por %p173, %p174
      %p176 = scmp.ne.s32.totalorder %s164, %s165
      %p177 = scmp.eq.s32.totalorder %s29, 3
      %p178 = por %p176, %p177
      %p180 = scmp.ne.s32.totalorder %s165, %s179
      %p181 = scmp.eq.s32.totalorder %s29, 0
      %p182 = por %p180, %p181
      %s183 = ssub.s32 %s23, %s30
      %p184 = scmp.eq.s32.totalorder %s183, 0
      %s186 = sadd.s32 %s185, 1
      %s187 = scalar_select %p184, %s185, %s186
      %p190 = pneg %p184
      %p191 = scmp.eq.s32.totalorder %s23, 3
      %p192 = por %p190, %p191
      %p193 = scmp.ne.s32.totalorder %s185, %s188
      %p194 = scmp.eq.s32.totalorder %s23, 0
      %p195 = por %p193, %p194
      %p196 = scmp.ne.s32.totalorder %s185, %s188
      %p197 = scmp.eq.s32.totalorder %s28, 3
      %p198 = por %p196, %p197
      %p199 = scmp.ne.s32.totalorder %s188, %s189
      %p200 = scmp.eq.s32.totalorder %s28, 0
      %p201 = por %p199, %p200
      %p202 = scmp.ne.s32.totalorder %s188, %s189
      %p203 = scmp.eq.s32.totalorder %s29, 3
      %p204 = por %p202, %p203
      %p206 = scmp.ne.s32.totalorder %s189, %s205
      %p207 = scmp.eq.s32.totalorder %s29, 0
      %p208 = por %p206, %p207
      %s209 = ssub.s32 %s23, %s30
      %p210 = scmp.eq.s32.totalorder %s209, 0
      %s212 = sadd.s32 %s211, 1
      %s213 = scalar_select %p210, %s211, %s212
      %p216 = pneg %p210
      %p217 = scmp.eq.s32.totalorder %s23, 3
      %p218 = por %p216, %p217
      %p219 = scmp.ne.s32.totalorder %s211, %s214
      %p220 = scmp.eq.s32.totalorder %s23, 0
      %p221 = por %p219, %p220
      %p222 = scmp.ne.s32.totalorder %s211, %s214
      %p223 = scmp.eq.s32.totalorder %s28, 3
      %p224 = por %p222, %p223
      %p225 = scmp.ne.s32.totalorder %s214, %s215
      %p226 = scmp.eq.s32.totalorder %s28, 0
      %p227 = por %p225, %p226
      %p228 = scmp.ne.s32.totalorder %s214, %s215
      %p229 = scmp.eq.s32.totalorder %s29, 3
      %p230 = por %p228, %p229
      %p232 = scmp.ne.s32.totalorder %s215, %s231
      %p233 = scmp.eq.s32.totalorder %s29, 0
      %p234 = por %p232, %p233
      %p235 = scmp.le.s32.totalorder 1, %s23
      %p236 = scmp.lt.s32.totalorder %s23, 5
      %p237 = pnand %p235, %p236
      %p238 = pneg %p237
      // Predicated region
      $region9: #{tpu_custom_call.1} parent=5 // pred_check
        _
      $region10: #{tpu_custom_call.1} parent=5 // pred_check_branch
        %240 = sbr.rel (%p237) target = $region12
      $region11: #{tpu_custom_call.1} parent=5 // pred_region
        %s241 = ssub.s32 %s23, 1
        // Predicated region
        $region13: #{tpu_custom_call.1} parent=11 // pred_check
          %p242 = pneg %p70
        $region14: #{tpu_custom_call.1} parent=11 // pred_check_branch
          %244 = sbr.rel (%p242) target = $region16
        $region15: #{tpu_custom_call.1} parent=11 // pred_region
          %s246 = ssub.s32 2048, 2048
          %247 = vsyncadd [#allocation6], %s246
          %s248 = sshll.u32 [#allocation5], 4
          %s249 = int_to_ptr.vmem [resolvable:$true] %s248
          %254 = dma.hbm_to_vmem [thread:$0]  %s1, 2048, %s249, [#allocation6], 128, 128, 8
        $region16: #{tpu_custom_call.1} parent=11 // pred_fallthru
          _
        // Predicated region
        $region17: #{tpu_custom_call.1} parent=11 // pred_check
          %p255 = pneg %p91
        $region18: #{tpu_custom_call.1} parent=11 // pred_check_branch
          %257 = sbr.rel (%p255) target = $region20
        $region19: #{tpu_custom_call.1} parent=11 // pred_region
          _
        $region20: #{tpu_custom_call.1} parent=11 // pred_fallthru
          _
        // Predicated region
        $region21: #{tpu_custom_call.1} parent=11 // pred_check
          %p258 = pneg %p112
        $region22: #{tpu_custom_call.1} parent=11 // pred_check_branch
          %260 = sbr.rel (%p258) target = $region24
        $region23: #{tpu_custom_call.1} parent=11 // pred_region
          %s262 = ssub.s32 2048, 2048
          %263 = vsyncadd [#allocation6], %s262
          %s264 = sshll.u32 [#allocation7], 4
          %s265 = int_to_ptr.vmem [resolvable:$true] %s264
          %270 = dma.hbm_to_vmem [thread:$0]  %s3, 2048, %s265, [#allocation6], 128, 128, 8
        $region24: #{tpu_custom_call.1} parent=11 // pred_fallthru
          _
        // Predicated region
        $region25: #{tpu_custom_call.1} parent=11 // pred_check
          %p271 = pneg %p133
        $region26: #{tpu_custom_call.1} parent=11 // pred_check_branch
          %273 = sbr.rel (%p271) target = $region28
        $region27: #{tpu_custom_call.1} parent=11 // pred_region
          _
        $region28: #{tpu_custom_call.1} parent=11 // pred_fallthru
          _
        // Predicated region
        $region29: #{tpu_custom_call.1} parent=11 // pred_check
          %p274 = pneg %p154
        $region30: #{tpu_custom_call.1} parent=11 // pred_check_branch
          %276 = sbr.rel (%p274) target = $region32
        $region31: #{tpu_custom_call.1} parent=11 // pred_region
          %s278 = ssub.s32 4096, 4096
          %279 = vsyncadd [#allocation9], %s278
          %s280 = sshll.u32 [#allocation8], 4
          %s281 = int_to_ptr.vmem [resolvable:$true] %s280
          %286 = dma.hbm_to_vmem [thread:$0]  %s5, 4096, %s281, [#allocation9], 256, 256, 16
        $region32: #{tpu_custom_call.1} parent=11 // pred_fallthru
          _
        // Predicated region
        $region33: #{tpu_custom_call.1} parent=11 // pred_check
          %p287 = pneg %p175
        $region34: #{tpu_custom_call.1} parent=11 // pred_check_branch
          %289 = sbr.rel (%p287) target = $region36
        $region35: #{tpu_custom_call.1} parent=11 // pred_region
          _
        $region36: #{tpu_custom_call.1} parent=11 // pred_fallthru
          _
      $region12: #{tpu_custom_call.1} parent=5 // pred_fallthru
        _
      %p290 = scmp.lt.s32.totalorder %s23, 4
      // Predicated region
      $region37: #{tpu_custom_call.1} parent=5 // pred_check
        %p291 = pneg %p290
      $region38: #{tpu_custom_call.1} parent=5 // pred_check_branch
        %293 = sbr.rel (%p291) target = $region40
      $region39: #{tpu_custom_call.1} parent=5 // pred_region
        // Predicated region
        $region41: #{tpu_custom_call.1} parent=39 // pred_check
          %p294 = pneg %p43
        $region42: #{tpu_custom_call.1} parent=39 // pred_check_branch
          %296 = sbr.rel (%p294) target = $region44
        $region43: #{tpu_custom_call.1} parent=39 // pred_region
          %s297 = sand.u32 %s33, 1
          %s298 = scalar_lea.sflag [#allocation3], %s297
          %s299 = sand.u32 %s33, 1
          %s300 = smul.addr %s299, 256
          %s301 = scalar_lea.vmem [#allocation2], %s300
          %s302 = smul.u32 16, %s23
          %s304 = ssub.s32 4096, 4096
          %305 = vsyncadd %s298, %s304
          %s306 = smul.addr %s302, 2
          %s307 = smul.addr %s306, 128
          %s308 = scalar_lea.hbm %s0, %s307
          %s309 = sshll.u32 %s301, 4
          %s310 = int_to_ptr.vmem [resolvable:$true] %s309
          %315 = dma.hbm_to_vmem [thread:$0]  %s308, 4096, %s310, %s298, 256, 256, 16
        $region44: #{tpu_custom_call.1} parent=39 // pred_fallthru
          _
      $region40: #{tpu_custom_call.1} parent=5 // pred_fallthru
        _
      %p316 = scmp.le.s32.totalorder 1, %s23
      %p317 = scmp.lt.s32.totalorder %s23, 5
      %p318 = pnand %p316, %p317
      %p319 = pneg %p318
      // Predicated region
      $region45: #{tpu_custom_call.1} parent=5 // pred_check
        _
      $region46: #{tpu_custom_call.1} parent=5 // pred_check_branch
        %321 = sbr.rel (%p318) target = $region48
      $region47: #{tpu_custom_call.1} parent=5 // pred_region
        %s322 = ssub.s32 %s23, 1
        %s323 = sand.u32 %s36, 1
        %s324 = scalar_lea.sflag [#allocation3], %s323
        %s325 = sand.u32 %s36, 1
        %s326 = smul.addr %s325, 256
        %s327 = scalar_lea.vmem [#allocation2], %s326
        // Predicated region
        $region49: #{tpu_custom_call.1} parent=47 // pred_check
          %p328 = pneg %p49
        $region50: #{tpu_custom_call.1} parent=47 // pred_check_branch
          %330 = sbr.rel (%p328) target = $region52
        $region51: #{tpu_custom_call.1} parent=47 // pred_region
          %331 = dma.done %s324, 4096
        $region52: #{tpu_custom_call.1} parent=47 // pred_fallthru
          _
        // Predicated region
        $region53: #{tpu_custom_call.1} parent=47 // pred_check
          %p332 = pneg %p70
        $region54: #{tpu_custom_call.1} parent=47 // pred_check_branch
          %334 = sbr.rel (%p332) target = $region56
        $region55: #{tpu_custom_call.1} parent=47 // pred_region
          %335 = dma.done [#allocation6], 2048
        $region56: #{tpu_custom_call.1} parent=47 // pred_fallthru
          _
        // Predicated region
        $region57: #{tpu_custom_call.1} parent=47 // pred_check
          %p336 = pneg %p112
        $region58: #{tpu_custom_call.1} parent=47 // pred_check_branch
          %338 = sbr.rel (%p336) target = $region60
        $region59: #{tpu_custom_call.1} parent=47 // pred_region
          %339 = dma.done [#allocation6], 2048
        $region60: #{tpu_custom_call.1} parent=47 // pred_fallthru
          _
        // Predicated region
        $region61: #{tpu_custom_call.1} parent=47 // pred_check
          %p340 = pneg %p154
        $region62: #{tpu_custom_call.1} parent=47 // pred_check_branch
          %342 = sbr.rel (%p340) target = $region64
        $region63: #{tpu_custom_call.1} parent=47 // pred_region
          %343 = dma.done [#allocation9], 4096
        $region64: #{tpu_custom_call.1} parent=47 // pred_fallthru
          _
        %s344 = sand.u32 %s36, 1
        %s345 = scalar_lea.sflag [#allocation3], %s344
        %s346 = sand.u32 %s36, 1
        %s347 = smul.addr %s346, 256
        %s348 = scalar_lea.vmem [#allocation2], %s347
        %p349 = pneg %p49
        %p350 = pneg %p46
        %p351 = pneg %p70
        %p352 = pneg %p67
        %p353 = pneg %p91
        %p354 = pneg %p88
        %p355 = pneg %p112
        %p356 = pneg %p109
        %p357 = pneg %p133
        %p358 = pneg %p130
        %p359 = pneg %p154
        %p360 = pneg %p151
        %p361 = pneg %p175
        %p362 = pneg %p172
        %p363 = pneg %p201
        %p364 = pneg %p198
        %s365 = sand.u32 %s188, 1
        %s366 = scalar_lea.sflag [#allocation4], %s365
        %s367 = sand.u32 %s188, 1
        %s368 = smul.addr %s367, 256
        %s369 = scalar_lea.vmem [#allocation10], %s368
        %p370 = pneg %p227
        %p371 = pneg %p224
        %s372 = smul.u32 16, %s28
        %p373 = scmp.lt.s32.totalorder %s372, 63
        %s374 = scalar_select %p373, %s372, 63
        %s375 = smul.addr %s374, 8
        %s376 = scalar_lea.vmem %s8, %s375
        %s377 = smul.u32 16, %s28
        %s378 = smul.u32 16, %s28
        %s379 = smul.u32 16, %s28
        %p380 = scmp.lt.s32.totalorder %s379, 63
        %s381 = scalar_select %p380, %s379, 63
        %s382 = smul.addr %s381, 8
        %s383 = scalar_lea.vmem %s8, %s382
        %s384 = smul.u32 16, %s28
        %v385 = vld [vmem:[%s327] sm:$0xff]
        %v386 = vld [vmem:[%s327 + $0x10] sm:$0xff]
        %v387 = vld [vmem:[%s327 + $0x20] sm:$0xff]
        %v388 = vld [vmem:[%s327 + $0x30] sm:$0xff]
        %v389 = vld [vmem:[%s327 + $0x40] sm:$0xff]
        %v390 = vld [vmem:[%s327 + $0x50] sm:$0xff]
        %v391 = vld [vmem:[%s327 + $0x60] sm:$0xff]
        %v392 = vld [vmem:[%s327 + $0x70] sm:$0xff]
        %v393 = vld [vmem:[%s327 + $0x80] sm:$0xff]
        %v394 = vld [vmem:[%s327 + $0x90] sm:$0xff]
        %v395 = vld [vmem:[%s327 + $0xa0] sm:$0xff]
        %v396 = vld [vmem:[%s327 + $0xb0] sm:$0xff]
        %v397 = vld [vmem:[%s327 + $0xc0] sm:$0xff]
        %v398 = vld [vmem:[%s327 + $0xd0] sm:$0xff]
        %v399 = vld [vmem:[%s327 + $0xe0] sm:$0xff]
        %v400 = vld [vmem:[%s327 + $0xf0] sm:$0xff]
        %v401 = vld [vmem:[%s327 + $0x8] sm:$0xff]
        %v402 = vld [vmem:[%s327 + $0x18] sm:$0xff]
        %v403 = vld [vmem:[%s327 + $0x28] sm:$0xff]
        %v404 = vld [vmem:[%s327 + $0x38] sm:$0xff]
        %v405 = vld [vmem:[%s327 + $0x48] sm:$0xff]
        %v406 = vld [vmem:[%s327 + $0x58] sm:$0xff]
        %v407 = vld [vmem:[%s327 + $0x68] sm:$0xff]
        %v408 = vld [vmem:[%s327 + $0x78] sm:$0xff]
        %v409 = vld [vmem:[%s327 + $0x88] sm:$0xff]
        %v410 = vld [vmem:[%s327 + $0x98] sm:$0xff]
        %v411 = vld [vmem:[%s327 + $0xa8] sm:$0xff]
        %v412 = vld [vmem:[%s327 + $0xb8] sm:$0xff]
        %v413 = vld [vmem:[%s327 + $0xc8] sm:$0xff]
        %v414 = vld [vmem:[%s327 + $0xd8] sm:$0xff]
        %v415 = vld [vmem:[%s327 + $0xe8] sm:$0xff]
        %v416 = vld [vmem:[%s327 + $0xf8] sm:$0xff]
        %v417 = vld [vmem:[#allocation5] sm:$0xff]
        %v418 = vld [vmem:[#allocation5 + $0x8] sm:$0xff]
        %v419 = vld [vmem:[#allocation5 + $0x10] sm:$0xff]
        %v420 = vld [vmem:[#allocation5 + $0x18] sm:$0xff]
        %v421 = vld [vmem:[#allocation5 + $0x20] sm:$0xff]
        %v422 = vld [vmem:[#allocation5 + $0x28] sm:$0xff]
        %v423 = vld [vmem:[#allocation5 + $0x30] sm:$0xff]
        %v424 = vld [vmem:[#allocation5 + $0x38] sm:$0xff]
        %v425 = vld [vmem:[#allocation5 + $0x40] sm:$0xff]
        %v426 = vld [vmem:[#allocation5 + $0x48] sm:$0xff]
        %v427 = vld [vmem:[#allocation5 + $0x50] sm:$0xff]
        %v428 = vld [vmem:[#allocation5 + $0x58] sm:$0xff]
        %v429 = vld [vmem:[#allocation5 + $0x60] sm:$0xff]
        %v430 = vld [vmem:[#allocation5 + $0x68] sm:$0xff]
        %v431 = vld [vmem:[#allocation5 + $0x70] sm:$0xff]
        %v432 = vld [vmem:[#allocation5 + $0x78] sm:$0xff]
        %v433 = vld [vmem:[%s2] sm:$0x1]
        %v435 = vlaneseq
        %v436 = vshrl.u32 %v435, 7
        %v437 = vsub.s32 0, %v436
        %v438 = vrot.slane %v433, %v437
        %440 = vmatprep.subr.mxu0 0.0
        %441 = vmatpush1.msra.mxu0 %v432
        %442 = vmatprep.subr.mxu0 0.0
        %443 = vmatpush1.msra.mxu0 %v431
        %444 = vmatprep.subr.mxu0 0.0
        %445 = vmatpush1.msra.mxu0 %v430
        %446 = vmatprep.subr.mxu0 0.0
        %447 = vmatpush1.msra.mxu0 %v429
        %448 = vmatprep.subr.mxu0 0.0
        %449 = vmatpush1.msra.mxu0 %v428
        %450 = vmatprep.subr.mxu0 0.0
        %451 = vmatpush1.msra.mxu0 %v427
        %452 = vmatprep.subr.mxu0 0.0
        %453 = vmatpush1.msra.mxu0 %v426
        %454 = vmatprep.subr.mxu0 0.0
        %455 = vmatpush1.msra.mxu0 %v425
        %456 = vmatprep.subr.mxu0 0.0
        %457 = vmatpush1.msra.mxu0 %v424
        %458 = vmatprep.subr.mxu0 0.0
        %459 = vmatpush1.msra.mxu0 %v423
        %460 = vmatprep.subr.mxu0 0.0
        %461 = vmatpush1.msra.mxu0 %v422
        %462 = vmatprep.subr.mxu0 0.0
        %463 = vmatpush1.msra.mxu0 %v421
        %464 = vmatprep.subr.mxu0 0.0
        %465 = vmatpush1.msra.mxu0 %v420
        %466 = vmatprep.subr.mxu0 0.0
        %467 = vmatpush1.msra.mxu0 %v419
        %468 = vmatprep.subr.mxu0 0.0
        %469 = vmatpush1.msra.mxu0 %v418
        %470 = vmatprep.subr.mxu0 0.0
        %471 = vmatpush1.msra.mxu0 %v417
        %472 = vmatprep.subr.mxu0 0.0
        %473 = vmatpush2.msra.mxu0 0.0
        %474 = vmatprep.subr.mxu0 0.0
        %475 = vmatpush2.msra.mxu0 0.0
        %476 = vmatprep.subr.mxu0 0.0
        %477 = vmatpush2.msra.mxu0 0.0
        %478 = vmatprep.subr.mxu0 0.0
        %479 = vmatpush2.msra.mxu0 0.0
        %480 = vmatprep.subr.mxu0 0.0
        %481 = vmatpush2.msra.mxu0 0.0
        %482 = vmatprep.subr.mxu0 0.0
        %483 = vmatpush2.msra.mxu0 0.0
        %484 = vmatprep.subr.mxu0 0.0
        %485 = vmatpush2.msra.mxu0 0.0
        %486 = vmatprep.subr.mxu0 0.0
        %487 = vmatpush2.msra.mxu0 0.0
        %488 = vmatprep.subr.mxu0 0.0
        %489 = vmatpush2.msra.mxu0 0.0
        %490 = vmatprep.subr.mxu0 0.0
        %491 = vmatpush2.msra.mxu0 0.0
        %492 = vmatprep.subr.mxu0 0.0
        %493 = vmatpush2.msra.mxu0 0.0
        %494 = vmatprep.subr.mxu0 0.0
        %495 = vmatpush2.msra.mxu0 0.0
        %496 = vmatprep.subr.mxu0 0.0
        %497 = vmatpush2.msra.mxu0 0.0
        %498 = vmatprep.subr.mxu0 0.0
        %499 = vmatpush2.msra.mxu0 0.0
        %500 = vmatprep.subr.mxu0 0.0
        %501 = vmatpush2.msra.mxu0 0.0
        %502 = vmatprep.subr.mxu0 0.0
        %503 = vmatpush2.msra.mxu0 0.0
        %504 = vmatprep.mubr.f32.mxu0 0.0
        %505 = vmatmul.mubr.f32.gmra.mxu0 %v385
        %v506 = vpop.f32.mrf.mxu0
        %v507 = vadd.f32 %v438, %v506
        %v508 = vpop.f32.mrf.mxu0
        %509 = vmatprep.mubr.f32.mxu0 0.0
        %510 = vmatmul.mubr.f32.gmra.mxu0 %v386
        %v511 = vpop.f32.mrf.mxu0
        %v512 = vadd.f32 %v438, %v511
        %v513 = vpop.f32.mrf.mxu0
        %514 = vmatprep.mubr.f32.mxu0 0.0
        %515 = vmatmul.mubr.f32.gmra.mxu0 %v387
        %v516 = vpop.f32.mrf.mxu0
        %v517 = vadd.f32 %v438, %v516
        %v518 = vpop.f32.mrf.mxu0
        %519 = vmatprep.mubr.f32.mxu0 0.0
        %520 = vmatmul.mubr.f32.gmra.mxu0 %v388
        %v521 = vpop.f32.mrf.mxu0
        %v522 = vadd.f32 %v438, %v521
        %v523 = vpop.f32.mrf.mxu0
        %524 = vmatprep.mubr.f32.mxu0 0.0
        %525 = vmatmul.mubr.f32.gmra.mxu0 %v389
        %v526 = vpop.f32.mrf.mxu0
        %v527 = vadd.f32 %v438, %v526
        %v528 = vpop.f32.mrf.mxu0
        %529 = vmatprep.mubr.f32.mxu0 0.0
        %530 = vmatmul.mubr.f32.gmra.mxu0 %v390
        %v531 = vpop.f32.mrf.mxu0
        %v532 = vadd.f32 %v438, %v531
        %v533 = vpop.f32.mrf.mxu0
        %534 = vmatprep.mubr.f32.mxu0 0.0
        %535 = vmatmul.mubr.f32.gmra.mxu0 %v391
        %v536 = vpop.f32.mrf.mxu0
        %v537 = vadd.f32 %v438, %v536
        %v538 = vpop.f32.mrf.mxu0
        %539 = vmatprep.mubr.f32.mxu0 0.0
        %540 = vmatmul.mubr.f32.gmra.mxu0 %v392
        %v541 = vpop.f32.mrf.mxu0
        %v542 = vadd.f32 %v438, %v541
        %v543 = vpop.f32.mrf.mxu0
        %544 = vmatprep.mubr.f32.mxu0 0.0
        %545 = vmatmul.mubr.f32.gmra.mxu0 %v393
        %v546 = vpop.f32.mrf.mxu0
        %v547 = vadd.f32 %v438, %v546
        %v548 = vpop.f32.mrf.mxu0
        %549 = vmatprep.mubr.f32.mxu0 0.0
        %550 = vmatmul.mubr.f32.gmra.mxu0 %v394
        %v551 = vpop.f32.mrf.mxu0
        %v552 = vadd.f32 %v438, %v551
        %v553 = vpop.f32.mrf.mxu0
        %554 = vmatprep.mubr.f32.mxu0 0.0
        %555 = vmatmul.mubr.f32.gmra.mxu0 %v395
        %v556 = vpop.f32.mrf.mxu0
        %v557 = vadd.f32 %v438, %v556
        %v558 = vpop.f32.mrf.mxu0
        %559 = vmatprep.mubr.f32.mxu0 0.0
        %560 = vmatmul.mubr.f32.gmra.mxu0 %v396
        %v561 = vpop.f32.mrf.mxu0
        %v562 = vadd.f32 %v438, %v561
        %v563 = vpop.f32.mrf.mxu0
        %564 = vmatprep.mubr.f32.mxu0 0.0
        %565 = vmatmul.mubr.f32.gmra.mxu0 %v397
        %v566 = vpop.f32.mrf.mxu0
        %v567 = vadd.f32 %v438, %v566
        %v568 = vpop.f32.mrf.mxu0
        %569 = vmatprep.mubr.f32.mxu0 0.0
        %570 = vmatmul.mubr.f32.gmra.mxu0 %v398
        %v571 = vpop.f32.mrf.mxu0
        %v572 = vadd.f32 %v438, %v571
        %v573 = vpop.f32.mrf.mxu0
        %574 = vmatprep.mubr.f32.mxu0 0.0
        %575 = vmatmul.mubr.f32.gmra.mxu0 %v399
        %v576 = vpop.f32.mrf.mxu0
        %v577 = vadd.f32 %v438, %v576
        %v578 = vpop.f32.mrf.mxu0
        %579 = vmatprep.mubr.f32.mxu0 0.0
        %580 = vmatmul.mubr.f32.gmra.mxu0 %v400
        %v581 = vpop.f32.mrf.mxu0
        %v582 = vadd.f32 %v438, %v581
        %v583 = vpop.f32.mrf.mxu0
        %584 = vdwg.mxu0
        %v585 = vmax.f32 %v507, 0.0
        %v586 = vmax.f32 %v512, 0.0
        %v587 = vmax.f32 %v517, 0.0
        %v588 = vmax.f32 %v522, 0.0
        %v589 = vmax.f32 %v527, 0.0
        %v590 = vmax.f32 %v532, 0.0
        %v591 = vmax.f32 %v537, 0.0
        %v592 = vmax.f32 %v542, 0.0
        %v593 = vmax.f32 %v547, 0.0
        %v594 = vmax.f32 %v552, 0.0
        %v595 = vmax.f32 %v557, 0.0
        %v596 = vmax.f32 %v562, 0.0
        %v597 = vmax.f32 %v567, 0.0
        %v598 = vmax.f32 %v572, 0.0
        %v599 = vmax.f32 %v577, 0.0
        %v600 = vmax.f32 %v582, 0.0
        %v601 = vld [vmem:[#allocation7] sm:$0xff]
        %v602 = vld [vmem:[#allocation7 + $0x8] sm:$0xff]
        %v603 = vld [vmem:[#allocation7 + $0x10] sm:$0xff]
        %v604 = vld [vmem:[#allocation7 + $0x18] sm:$0xff]
        %v605 = vld [vmem:[#allocation7 + $0x20] sm:$0xff]
        %v606 = vld [vmem:[#allocation7 + $0x28] sm:$0xff]
        %v607 = vld [vmem:[#allocation7 + $0x30] sm:$0xff]
        %v608 = vld [vmem:[#allocation7 + $0x38] sm:$0xff]
        %v609 = vld [vmem:[#allocation7 + $0x40] sm:$0xff]
        %v610 = vld [vmem:[#allocation7 + $0x48] sm:$0xff]
        %v611 = vld [vmem:[#allocation7 + $0x50] sm:$0xff]
        %v612 = vld [vmem:[#allocation7 + $0x58] sm:$0xff]
        %v613 = vld [vmem:[#allocation7 + $0x60] sm:$0xff]
        %v614 = vld [vmem:[#allocation7 + $0x68] sm:$0xff]
        %v615 = vld [vmem:[#allocation7 + $0x70] sm:$0xff]
        %v616 = vld [vmem:[#allocation7 + $0x78] sm:$0xff]
        %v617 = vld [vmem:[%s4] sm:$0x1]
        %v619 = vlaneseq
        %v620 = vshrl.u32 %v619, 7
        %v621 = vsub.s32 0, %v620
        %v622 = vrot.slane %v617, %v621
        %624 = vmatprep.subr.mxu0 0.0
        %625 = vmatpush1.msra.mxu0 %v616
        %626 = vmatprep.subr.mxu0 0.0
        %627 = vmatpush1.msra.mxu0 %v615
        %628 = vmatprep.subr.mxu0 0.0
        %629 = vmatpush1.msra.mxu0 %v614
        %630 = vmatprep.subr.mxu0 0.0
        %631 = vmatpush1.msra.mxu0 %v613
        %632 = vmatprep.subr.mxu0 0.0
        %633 = vmatpush1.msra.mxu0 %v612
        %634 = vmatprep.subr.mxu0 0.0
        %635 = vmatpush1.msra.mxu0 %v611
        %636 = vmatprep.subr.mxu0 0.0
        %637 = vmatpush1.msra.mxu0 %v610
        %638 = vmatprep.subr.mxu0 0.0
        %639 = vmatpush1.msra.mxu0 %v609
        %640 = vmatprep.subr.mxu0 0.0
        %641 = vmatpush1.msra.mxu0 %v608
        %642 = vmatprep.subr.mxu0 0.0
        %643 = vmatpush1.msra.mxu0 %v607
        %644 = vmatprep.subr.mxu0 0.0
        %645 = vmatpush1.msra.mxu0 %v606
        %646 = vmatprep.subr.mxu0 0.0
        %647 = vmatpush1.msra.mxu0 %v605
        %648 = vmatprep.subr.mxu0 0.0
        %649 = vmatpush1.msra.mxu0 %v604
        %650 = vmatprep.subr.mxu0 0.0
        %651 = vmatpush1.msra.mxu0 %v603
        %652 = vmatprep.subr.mxu0 0.0
        %653 = vmatpush1.msra.mxu0 %v602
        %654 = vmatprep.subr.mxu0 0.0
        %655 = vmatpush1.msra.mxu0 %v601
        %656 = vmatprep.subr.mxu0 0.0
        %657 = vmatpush2.msra.mxu0 0.0
        %658 = vmatprep.subr.mxu0 0.0
        %659 = vmatpush2.msra.mxu0 0.0
        %660 = vmatprep.subr.mxu0 0.0
        %661 = vmatpush2.msra.mxu0 0.0
        %662 = vmatprep.subr.mxu0 0.0
        %663 = vmatpush2.msra.mxu0 0.0
        %664 = vmatprep.subr.mxu0 0.0
        %665 = vmatpush2.msra.mxu0 0.0
        %666 = vmatprep.subr.mxu0 0.0
        %667 = vmatpush2.msra.mxu0 0.0
        %668 = vmatprep.subr.mxu0 0.0
        %669 = vmatpush2.msra.mxu0 0.0
        %670 = vmatprep.subr.mxu0 0.0
        %671 = vmatpush2.msra.mxu0 0.0
        %672 = vmatprep.subr.mxu0 0.0
        %673 = vmatpush2.msra.mxu0 0.0
        %674 = vmatprep.subr.mxu0 0.0
        %675 = vmatpush2.msra.mxu0 0.0
        %676 = vmatprep.subr.mxu0 0.0
        %677 = vmatpush2.msra.mxu0 0.0
        %678 = vmatprep.subr.mxu0 0.0
        %679 = vmatpush2.msra.mxu0 0.0
        %680 = vmatprep.subr.mxu0 0.0
        %681 = vmatpush2.msra.mxu0 0.0
        %682 = vmatprep.subr.mxu0 0.0
        %683 = vmatpush2.msra.mxu0 0.0
        %684 = vmatprep.subr.mxu0 0.0
        %685 = vmatpush2.msra.mxu0 0.0
        %686 = vmatprep.subr.mxu0 0.0
        %687 = vmatpush2.msra.mxu0 0.0
        %688 = vmatprep.mubr.f32.mxu0 0.0
        %689 = vmatmul.mubr.f32.gmra.mxu0 %v585
        %v690 = vpop.f32.mrf.mxu0
        %v691 = vadd.f32 %v622, %v690
        %v692 = vpop.f32.mrf.mxu0
        %693 = vmatprep.mubr.f32.mxu0 0.0
        %694 = vmatmul.mubr.f32.gmra.mxu0 %v586
        %v695 = vpop.f32.mrf.mxu0
        %v696 = vadd.f32 %v622, %v695
        %v697 = vpop.f32.mrf.mxu0
        %698 = vmatprep.mubr.f32.mxu0 0.0
        %699 = vmatmul.mubr.f32.gmra.mxu0 %v587
        %v700 = vpop.f32.mrf.mxu0
        %v701 = vadd.f32 %v622, %v700
        %v702 = vpop.f32.mrf.mxu0
        %703 = vmatprep.mubr.f32.mxu0 0.0
        %704 = vmatmul.mubr.f32.gmra.mxu0 %v588
        %v705 = vpop.f32.mrf.mxu0
        %v706 = vadd.f32 %v622, %v705
        %v707 = vpop.f32.mrf.mxu0
        %708 = vmatprep.mubr.f32.mxu0 0.0
        %709 = vmatmul.mubr.f32.gmra.mxu0 %v589
        %v710 = vpop.f32.mrf.mxu0
        %v711 = vadd.f32 %v622, %v710
        %v712 = vpop.f32.mrf.mxu0
        %713 = vmatprep.mubr.f32.mxu0 0.0
        %714 = vmatmul.mubr.f32.gmra.mxu0 %v590
        %v715 = vpop.f32.mrf.mxu0
        %v716 = vadd.f32 %v622, %v715
        %v717 = vpop.f32.mrf.mxu0
        %718 = vmatprep.mubr.f32.mxu0 0.0
        %719 = vmatmul.mubr.f32.gmra.mxu0 %v591
        %v720 = vpop.f32.mrf.mxu0
        %v721 = vadd.f32 %v622, %v720
        %v722 = vpop.f32.mrf.mxu0
        %723 = vmatprep.mubr.f32.mxu0 0.0
        %724 = vmatmul.mubr.f32.gmra.mxu0 %v592
        %v725 = vpop.f32.mrf.mxu0
        %v726 = vadd.f32 %v622, %v725
        %v727 = vpop.f32.mrf.mxu0
        %728 = vmatprep.mubr.f32.mxu0 0.0
        %729 = vmatmul.mubr.f32.gmra.mxu0 %v593
        %v730 = vpop.f32.mrf.mxu0
        %v731 = vadd.f32 %v622, %v730
        %v732 = vpop.f32.mrf.mxu0
        %733 = vmatprep.mubr.f32.mxu0 0.0
        %734 = vmatmul.mubr.f32.gmra.mxu0 %v594
        %v735 = vpop.f32.mrf.mxu0
        %v736 = vadd.f32 %v622, %v735
        %v737 = vpop.f32.mrf.mxu0
        %738 = vmatprep.mubr.f32.mxu0 0.0
        %739 = vmatmul.mubr.f32.gmra.mxu0 %v595
        %v740 = vpop.f32.mrf.mxu0
        %v741 = vadd.f32 %v622, %v740
        %v742 = vpop.f32.mrf.mxu0
        %743 = vmatprep.mubr.f32.mxu0 0.0
        %744 = vmatmul.mubr.f32.gmra.mxu0 %v596
        %v745 = vpop.f32.mrf.mxu0
        %v746 = vadd.f32 %v622, %v745
        %v747 = vpop.f32.mrf.mxu0
        %748 = vmatprep.mubr.f32.mxu0 0.0
        %749 = vmatmul.mubr.f32.gmra.mxu0 %v597
        %v750 = vpop.f32.mrf.mxu0
        %v751 = vadd.f32 %v622, %v750
        %v752 = vpop.f32.mrf.mxu0
        %753 = vmatprep.mubr.f32.mxu0 0.0
        %754 = vmatmul.mubr.f32.gmra.mxu0 %v598
        %v755 = vpop.f32.mrf.mxu0
        %v756 = vadd.f32 %v622, %v755
        %v757 = vpop.f32.mrf.mxu0
        %758 = vmatprep.mubr.f32.mxu0 0.0
        %759 = vmatmul.mubr.f32.gmra.mxu0 %v599
        %v760 = vpop.f32.mrf.mxu0
        %v761 = vadd.f32 %v622, %v760
        %v762 = vpop.f32.mrf.mxu0
        %763 = vmatprep.mubr.f32.mxu0 0.0
        %764 = vmatmul.mubr.f32.gmra.mxu0 %v600
        %v765 = vpop.f32.mrf.mxu0
        %v766 = vadd.f32 %v622, %v765
        %v767 = vpop.f32.mrf.mxu0
        %768 = vdwg.mxu0
        %v769 = vmax.f32 %v691, 0.0
        %v770 = vmax.f32 %v696, 0.0
        %v771 = vmax.f32 %v701, 0.0
        %v772 = vmax.f32 %v706, 0.0
        %v773 = vmax.f32 %v711, 0.0
        %v774 = vmax.f32 %v716, 0.0
        %v775 = vmax.f32 %v721, 0.0
        %v776 = vmax.f32 %v726, 0.0
        %v777 = vmax.f32 %v731, 0.0
        %v778 = vmax.f32 %v736, 0.0
        %v779 = vmax.f32 %v741, 0.0
        %v780 = vmax.f32 %v746, 0.0
        %v781 = vmax.f32 %v751, 0.0
        %v782 = vmax.f32 %v756, 0.0
        %v783 = vmax.f32 %v761, 0.0
        %v784 = vmax.f32 %v766, 0.0
        %v785 = vld [vmem:[#allocation8] sm:$0xff]
        %v786 = vld [vmem:[#allocation8 + $0x8] sm:$0xff]
        %v787 = vld [vmem:[#allocation8 + $0x10] sm:$0xff]
        %v788 = vld [vmem:[#allocation8 + $0x18] sm:$0xff]
        %v789 = vld [vmem:[#allocation8 + $0x20] sm:$0xff]
        %v790 = vld [vmem:[#allocation8 + $0x28] sm:$0xff]
        %v791 = vld [vmem:[#allocation8 + $0x30] sm:$0xff]
        %v792 = vld [vmem:[#allocation8 + $0x38] sm:$0xff]
        %v793 = vld [vmem:[#allocation8 + $0x40] sm:$0xff]
        %v794 = vld [vmem:[#allocation8 + $0x48] sm:$0xff]
        %v795 = vld [vmem:[#allocation8 + $0x50] sm:$0xff]
        %v796 = vld [vmem:[#allocation8 + $0x58] sm:$0xff]
        %v797 = vld [vmem:[#allocation8 + $0x60] sm:$0xff]
        %v798 = vld [vmem:[#allocation8 + $0x68] sm:$0xff]
        %v799 = vld [vmem:[#allocation8 + $0x70] sm:$0xff]
        %v800 = vld [vmem:[#allocation8 + $0x78] sm:$0xff]
        %v801 = vld [vmem:[#allocation8 + $0x80] sm:$0xff]
        %v802 = vld [vmem:[#allocation8 + $0x88] sm:$0xff]
        %v803 = vld [vmem:[#allocation8 + $0x90] sm:$0xff]
        %v804 = vld [vmem:[#allocation8 + $0x98] sm:$0xff]
        %v805 = vld [vmem:[#allocation8 + $0xa0] sm:$0xff]
        %v806 = vld [vmem:[#allocation8 + $0xa8] sm:$0xff]
        %v807 = vld [vmem:[#allocation8 + $0xb0] sm:$0xff]
        %v808 = vld [vmem:[#allocation8 + $0xb8] sm:$0xff]
        %v809 = vld [vmem:[#allocation8 + $0xc0] sm:$0xff]
        %v810 = vld [vmem:[#allocation8 + $0xc8] sm:$0xff]
        %v811 = vld [vmem:[#allocation8 + $0xd0] sm:$0xff]
        %v812 = vld [vmem:[#allocation8 + $0xd8] sm:$0xff]
        %v813 = vld [vmem:[#allocation8 + $0xe0] sm:$0xff]
        %v814 = vld [vmem:[#allocation8 + $0xe8] sm:$0xff]
        %v815 = vld [vmem:[#allocation8 + $0xf0] sm:$0xff]
        %v816 = vld [vmem:[#allocation8 + $0xf8] sm:$0xff]
        %v817 = vld [vmem:[%s6] sm:$0x3]
        %v819 = vlaneseq
        %v820 = vshrl.u32 %v819, 7
        %v821 = vsub.s32 0, %v820
        %v822 = vrot.slane %v817, %v821
        %v823 = vlaneseq
        %v824 = vshrl.u32 %v823, 7
        %v825 = vsub.s32 1, %v824
        %v826 = vrot.slane %v817, %v825
        %829 = vmatprep.subr.mxu0 %v816
        %830 = vmatpush1.msra.mxu0 %v815
        %831 = vmatprep.subr.mxu0 %v814
        %832 = vmatpush1.msra.mxu0 %v813
        %833 = vmatprep.subr.mxu0 %v812
        %834 = vmatpush1.msra.mxu0 %v811
        %835 = vmatprep.subr.mxu0 %v810
        %836 = vmatpush1.msra.mxu0 %v809
        %837 = vmatprep.subr.mxu0 %v808
        %838 = vmatpush1.msra.mxu0 %v807
        %839 = vmatprep.subr.mxu0 %v806
        %840 = vmatpush1.msra.mxu0 %v805
        %841 = vmatprep.subr.mxu0 %v804
        %842 = vmatpush1.msra.mxu0 %v803
        %843 = vmatprep.subr.mxu0 %v802
        %844 = vmatpush1.msra.mxu0 %v801
        %845 = vmatprep.subr.mxu0 %v800
        %846 = vmatpush1.msra.mxu0 %v799
        %847 = vmatprep.subr.mxu0 %v798
        %848 = vmatpush1.msra.mxu0 %v797
        %849 = vmatprep.subr.mxu0 %v796
        %850 = vmatpush1.msra.mxu0 %v795
        %851 = vmatprep.subr.mxu0 %v794
        %852 = vmatpush1.msra.mxu0 %v793
        %853 = vmatprep.subr.mxu0 %v792
        %854 = vmatpush1.msra.mxu0 %v791
        %855 = vmatprep.subr.mxu0 %v790
        %856 = vmatpush1.msra.mxu0 %v789
        %857 = vmatprep.subr.mxu0 %v788
        %858 = vmatpush1.msra.mxu0 %v787
        %859 = vmatprep.subr.mxu0 %v786
        %860 = vmatpush1.msra.mxu0 %v785
        %861 = vmatprep.subr.mxu0 0.0
        %862 = vmatpush2.msra.mxu0 0.0
        %863 = vmatprep.subr.mxu0 0.0
        %864 = vmatpush2.msra.mxu0 0.0
        %865 = vmatprep.subr.mxu0 0.0
        %866 = vmatpush2.msra.mxu0 0.0
        %867 = vmatprep.subr.mxu0 0.0
        %868 = vmatpush2.msra.mxu0 0.0
        %869 = vmatprep.subr.mxu0 0.0
        %870 = vmatpush2.msra.mxu0 0.0
        %871 = vmatprep.subr.mxu0 0.0
        %872 = vmatpush2.msra.mxu0 0.0
        %873 = vmatprep.subr.mxu0 0.0
        %874 = vmatpush2.msra.mxu0 0.0
        %875 = vmatprep.subr.mxu0 0.0
        %876 = vmatpush2.msra.mxu0 0.0
        %877 = vmatprep.subr.mxu0 0.0
        %878 = vmatpush2.msra.mxu0 0.0
        %879 = vmatprep.subr.mxu0 0.0
        %880 = vmatpush2.msra.mxu0 0.0
        %881 = vmatprep.subr.mxu0 0.0
        %882 = vmatpush2.msra.mxu0 0.0
        %883 = vmatprep.subr.mxu0 0.0
        %884 = vmatpush2.msra.mxu0 0.0
        %885 = vmatprep.subr.mxu0 0.0
        %886 = vmatpush2.msra.mxu0 0.0
        %887 = vmatprep.subr.mxu0 0.0
        %888 = vmatpush2.msra.mxu0 0.0
        %889 = vmatprep.subr.mxu0 0.0
        %890 = vmatpush2.msra.mxu0 0.0
        %891 = vmatprep.subr.mxu0 0.0
        %892 = vmatpush2.msra.mxu0 0.0
        %893 = vmatprep.mubr.f32.mxu0 0.0
        %894 = vmatmul.mubr.f32.gmra.mxu0 %v769
        %v895 = vpop.f32.mrf.mxu0
        %v896 = vadd.f32 %v822, %v895
        %v897 = vpop.f32.mrf.mxu0
        %v898 = vadd.f32 %v826, %v897
        %899 = vmatprep.mubr.f32.mxu0 0.0
        %900 = vmatmul.mubr.f32.gmra.mxu0 %v770
        %v901 = vpop.f32.mrf.mxu0
        %v902 = vadd.f32 %v822, %v901
        %v903 = vpop.f32.mrf.mxu0
        %v904 = vadd.f32 %v826, %v903
        %905 = vmatprep.mubr.f32.mxu0 0.0
        %906 = vmatmul.mubr.f32.gmra.mxu0 %v771
        %v907 = vpop.f32.mrf.mxu0
        %v908 = vadd.f32 %v822, %v907
        %v909 = vpop.f32.mrf.mxu0
        %v910 = vadd.f32 %v826, %v909
        %911 = vmatprep.mubr.f32.mxu0 0.0
        %912 = vmatmul.mubr.f32.gmra.mxu0 %v772
        %v913 = vpop.f32.mrf.mxu0
        %v914 = vadd.f32 %v822, %v913
        %v915 = vpop.f32.mrf.mxu0
        %v916 = vadd.f32 %v826, %v915
        %917 = vmatprep.mubr.f32.mxu0 0.0
        %918 = vmatmul.mubr.f32.gmra.mxu0 %v773
        %v919 = vpop.f32.mrf.mxu0
        %v920 = vadd.f32 %v822, %v919
        %v921 = vpop.f32.mrf.mxu0
        %v922 = vadd.f32 %v826, %v921
        %923 = vmatprep.mubr.f32.mxu0 0.0
        %924 = vmatmul.mubr.f32.gmra.mxu0 %v774
        %v925 = vpop.f32.mrf.mxu0
        %v926 = vadd.f32 %v822, %v925
        %v927 = vpop.f32.mrf.mxu0
        %v928 = vadd.f32 %v826, %v927
        %929 = vmatprep.mubr.f32.mxu0 0.0
        %930 = vmatmul.mubr.f32.gmra.mxu0 %v775
        %v931 = vpop.f32.mrf.mxu0
        %v932 = vadd.f32 %v822, %v931
        %v933 = vpop.f32.mrf.mxu0
        %v934 = vadd.f32 %v826, %v933
        %935 = vmatprep.mubr.f32.mxu0 0.0
        %936 = vmatmul.mubr.f32.gmra.mxu0 %v776
        %v937 = vpop.f32.mrf.mxu0
        %v938 = vadd.f32 %v822, %v937
        %v939 = vpop.f32.mrf.mxu0
        %v940 = vadd.f32 %v826, %v939
        %941 = vmatprep.mubr.f32.mxu0 0.0
        %942 = vmatmul.mubr.f32.gmra.mxu0 %v777
        %v943 = vpop.f32.mrf.mxu0
        %v944 = vadd.f32 %v822, %v943
        %v945 = vpop.f32.mrf.mxu0
        %v946 = vadd.f32 %v826, %v945
        %947 = vmatprep.mubr.f32.mxu0 0.0
        %948 = vmatmul.mubr.f32.gmra.mxu0 %v778
        %v949 = vpop.f32.mrf.mxu0
        %v950 = vadd.f32 %v822, %v949
        %v951 = vpop.f32.mrf.mxu0
        %v952 = vadd.f32 %v826, %v951
        %953 = vmatprep.mubr.f32.mxu0 0.0
        %954 = vmatmul.mubr.f32.gmra.mxu0 %v779
        %v955 = vpop.f32.mrf.mxu0
        %v956 = vadd.f32 %v822, %v955
        %v957 = vpop.f32.mrf.mxu0
        %v958 = vadd.f32 %v826, %v957
        %959 = vmatprep.mubr.f32.mxu0 0.0
        %960 = vmatmul.mubr.f32.gmra.mxu0 %v780
        %v961 = vpop.f32.mrf.mxu0
        %v962 = vadd.f32 %v822, %v961
        %v963 = vpop.f32.mrf.mxu0
        %v964 = vadd.f32 %v826, %v963
        %965 = vmatprep.mubr.f32.mxu0 0.0
        %966 = vmatmul.mubr.f32.gmra.mxu0 %v781
        %v967 = vpop.f32.mrf.mxu0
        %v968 = vadd.f32 %v822, %v967
        %v969 = vpop.f32.mrf.mxu0
        %v970 = vadd.f32 %v826, %v969
        %971 = vmatprep.mubr.f32.mxu0 0.0
        %972 = vmatmul.mubr.f32.gmra.mxu0 %v782
        %v973 = vpop.f32.mrf.mxu0
        %v974 = vadd.f32 %v822, %v973
        %v975 = vpop.f32.mrf.mxu0
        %v976 = vadd.f32 %v826, %v975
        %977 = vmatprep.mubr.f32.mxu0 0.0
        %978 = vmatmul.mubr.f32.gmra.mxu0 %v783
        %v979 = vpop.f32.mrf.mxu0
        %v980 = vadd.f32 %v822, %v979
        %v981 = vpop.f32.mrf.mxu0
        %v982 = vadd.f32 %v826, %v981
        %983 = vmatprep.mubr.f32.mxu0 0.0
        %984 = vmatmul.mubr.f32.gmra.mxu0 %v784
        %v985 = vpop.f32.mrf.mxu0
        %v986 = vadd.f32 %v822, %v985
        %v987 = vpop.f32.mrf.mxu0
        %v988 = vadd.f32 %v826, %v987
        %989 = vdwg.mxu0
        %v990 = vtanh.pop %v896
        %v991 = vtanh.pop %v902
        %v992 = vtanh.pop %v908
        %v993 = vtanh.pop %v914
        %v994 = vtanh.pop %v920
        %v995 = vtanh.pop %v926
        %v996 = vtanh.pop %v932
        %v997 = vtanh.pop %v938
        %v998 = vtanh.pop %v944
        %v999 = vtanh.pop %v950
        %v1000 = vtanh.pop %v956
        %v1001 = vtanh.pop %v962
        %v1002 = vtanh.pop %v968
        %v1003 = vtanh.pop %v974
        %v1004 = vtanh.pop %v980
        %v1005 = vtanh.pop %v986
        %v1006 = vmul.f32 %v990, 1.442695
        %v1007 = vpow.pop %v1006
        %v1008 = vmul.f32 %v991, 1.442695
        %v1009 = vpow.pop %v1008
        %v1010 = vmul.f32 %v992, 1.442695
        %v1011 = vpow.pop %v1010
        %v1012 = vmul.f32 %v993, 1.442695
        %v1013 = vpow.pop %v1012
        %v1014 = vmul.f32 %v994, 1.442695
        %v1015 = vpow.pop %v1014
        %v1016 = vmul.f32 %v995, 1.442695
        %v1017 = vpow.pop %v1016
        %v1018 = vmul.f32 %v996, 1.442695
        %v1019 = vpow.pop %v1018
        %v1020 = vmul.f32 %v997, 1.442695
        %v1021 = vpow.pop %v1020
        %v1022 = vmul.f32 %v998, 1.442695
        %v1023 = vpow.pop %v1022
        %v1024 = vmul.f32 %v999, 1.442695
        %v1025 = vpow.pop %v1024
        %v1026 = vmul.f32 %v1000, 1.442695
        %v1027 = vpow.pop %v1026
        %v1028 = vmul.f32 %v1001, 1.442695
        %v1029 = vpow.pop %v1028
        %v1030 = vmul.f32 %v1002, 1.442695
        %v1031 = vpow.pop %v1030
        %v1032 = vmul.f32 %v1003, 1.442695
        %v1033 = vpow.pop %v1032
        %v1034 = vmul.f32 %v1004, 1.442695
        %v1035 = vpow.pop %v1034
        %v1036 = vmul.f32 %v1005, 1.442695
        %v1037 = vpow.pop %v1036
        %v1038 = vmul.f32 %v401, %v1007
        %v1039 = vmul.f32 %v402, %v1009
        %v1040 = vmul.f32 %v403, %v1011
        %v1041 = vmul.f32 %v404, %v1013
        %v1042 = vmul.f32 %v405, %v1015
        %v1043 = vmul.f32 %v406, %v1017
        %v1044 = vmul.f32 %v407, %v1019
        %v1045 = vmul.f32 %v408, %v1021
        %v1046 = vmul.f32 %v409, %v1023
        %v1047 = vmul.f32 %v410, %v1025
        %v1048 = vmul.f32 %v411, %v1027
        %v1049 = vmul.f32 %v412, %v1029
        %v1050 = vmul.f32 %v413, %v1031
        %v1051 = vmul.f32 %v414, %v1033
        %v1052 = vmul.f32 %v415, %v1035
        %v1053 = vmul.f32 %v416, %v1037
        %v1054 = vadd.f32 %v1038, %v898
        %v1055 = vadd.f32 %v1039, %v904
        %v1056 = vadd.f32 %v1040, %v910
        %v1057 = vadd.f32 %v1041, %v916
        %v1058 = vadd.f32 %v1042, %v922
        %v1059 = vadd.f32 %v1043, %v928
        %v1060 = vadd.f32 %v1044, %v934
        %v1061 = vadd.f32 %v1045, %v940
        %v1062 = vadd.f32 %v1046, %v946
        %v1063 = vadd.f32 %v1047, %v952
        %v1064 = vadd.f32 %v1048, %v958
        %v1065 = vadd.f32 %v1049, %v964
        %v1066 = vadd.f32 %v1050, %v970
        %v1067 = vadd.f32 %v1051, %v976
        %v1068 = vadd.f32 %v1052, %v982
        %v1069 = vadd.f32 %v1053, %v988
        %1070 = vst [vmem:[%s369] sm:$0xff] %v1054
        %1071 = vst [vmem:[%s369 + $0x10] sm:$0xff] %v1055
        %1072 = vst [vmem:[%s369 + $0x20] sm:$0xff] %v1056
        %1073 = vst [vmem:[%s369 + $0x30] sm:$0xff] %v1057
        %1074 = vst [vmem:[%s369 + $0x40] sm:$0xff] %v1058
        %1075 = vst [vmem:[%s369 + $0x50] sm:$0xff] %v1059
        %1076 = vst [vmem:[%s369 + $0x60] sm:$0xff] %v1060
        %1077 = vst [vmem:[%s369 + $0x70] sm:$0xff] %v1061
        %1078 = vst [vmem:[%s369 + $0x80] sm:$0xff] %v1062
        %1079 = vst [vmem:[%s369 + $0x90] sm:$0xff] %v1063
        %1080 = vst [vmem:[%s369 + $0xa0] sm:$0xff] %v1064
        %1081 = vst [vmem:[%s369 + $0xb0] sm:$0xff] %v1065
        %1082 = vst [vmem:[%s369 + $0xc0] sm:$0xff] %v1066
        %1083 = vst [vmem:[%s369 + $0xd0] sm:$0xff] %v1067
        %1084 = vst [vmem:[%s369 + $0xe0] sm:$0xff] %v1068
        %1085 = vst [vmem:[%s369 + $0xf0] sm:$0xff] %v1069
        %1086 = vst [vmem:[%s369 + $0x8] sm:$0xff] %v385
        %1087 = vst [vmem:[%s369 + $0x18] sm:$0xff] %v386
        %1088 = vst [vmem:[%s369 + $0x28] sm:$0xff] %v387
        %1089 = vst [vmem:[%s369 + $0x38] sm:$0xff] %v388
        %1090 = vst [vmem:[%s369 + $0x48] sm:$0xff] %v389
        %1091 = vst [vmem:[%s369 + $0x58] sm:$0xff] %v390
        %1092 = vst [vmem:[%s369 + $0x68] sm:$0xff] %v391
        %1093 = vst [vmem:[%s369 + $0x78] sm:$0xff] %v392
        %1094 = vst [vmem:[%s369 + $0x88] sm:$0xff] %v393
        %1095 = vst [vmem:[%s369 + $0x98] sm:$0xff] %v394
        %1096 = vst [vmem:[%s369 + $0xa8] sm:$0xff] %v395
        %1097 = vst [vmem:[%s369 + $0xb8] sm:$0xff] %v396
        %1098 = vst [vmem:[%s369 + $0xc8] sm:$0xff] %v397
        %1099 = vst [vmem:[%s369 + $0xd8] sm:$0xff] %v398
        %1100 = vst [vmem:[%s369 + $0xe8] sm:$0xff] %v399
        %1101 = vst [vmem:[%s369 + $0xf8] sm:$0xff] %v400
        %1102 = vadd.xlane.f32.xlu0 %v990
        %v1103 = vpop.xlane.xlu0 %1102
        %1104 = vadd.xlane.f32.xlu0 %v991
        %v1105 = vpop.xlane.xlu0 %1104
        %1106 = vadd.xlane.f32.xlu0 %v992
        %v1107 = vpop.xlane.xlu0 %1106
        %1108 = vadd.xlane.f32.xlu0 %v993
        %v1109 = vpop.xlane.xlu0 %1108
        %1110 = vadd.xlane.f32.xlu0 %v994
        %v1111 = vpop.xlane.xlu0 %1110
        %1112 = vadd.xlane.f32.xlu0 %v995
        %v1113 = vpop.xlane.xlu0 %1112
        %1114 = vadd.xlane.f32.xlu0 %v996
        %v1115 = vpop.xlane.xlu0 %1114
        %1116 = vadd.xlane.f32.xlu0 %v997
        %v1117 = vpop.xlane.xlu0 %1116
        %1118 = vadd.xlane.f32.xlu0 %v998
        %v1119 = vpop.xlane.xlu0 %1118
        %1120 = vadd.xlane.f32.xlu0 %v999
        %v1121 = vpop.xlane.xlu0 %1120
        %1122 = vadd.xlane.f32.xlu0 %v1000
        %v1123 = vpop.xlane.xlu0 %1122
        %1124 = vadd.xlane.f32.xlu0 %v1001
        %v1125 = vpop.xlane.xlu0 %1124
        %1126 = vadd.xlane.f32.xlu0 %v1002
        %v1127 = vpop.xlane.xlu0 %1126
        %1128 = vadd.xlane.f32.xlu0 %v1003
        %v1129 = vpop.xlane.xlu0 %1128
        %1130 = vadd.xlane.f32.xlu0 %v1004
        %v1131 = vpop.xlane.xlu0 %1130
        %1132 = vadd.xlane.f32.xlu0 %v1005
        %v1133 = vpop.xlane.xlu0 %1132
        %vm1134 = vcmask 7168
        %1135 = vst.msk [vmem:[%s383] sm:$0xff] %vm1134, %v1103
        %1136 = vst.msk [vmem:[%s383 + $0x8] sm:$0xff] %vm1134, %v1105
        %1137 = vst.msk [vmem:[%s383 + $0x10] sm:$0xff] %vm1134, %v1107
        %1138 = vst.msk [vmem:[%s383 + $0x18] sm:$0xff] %vm1134, %v1109
        %1139 = vst.msk [vmem:[%s383 + $0x20] sm:$0xff] %vm1134, %v1111
        %1140 = vst.msk [vmem:[%s383 + $0x28] sm:$0xff] %vm1134, %v1113
        %1141 = vst.msk [vmem:[%s383 + $0x30] sm:$0xff] %vm1134, %v1115
        %1142 = vst.msk [vmem:[%s383 + $0x38] sm:$0xff] %vm1134, %v1117
        %1143 = vst.msk [vmem:[%s383 + $0x40] sm:$0xff] %vm1134, %v1119
        %1144 = vst.msk [vmem:[%s383 + $0x48] sm:$0xff] %vm1134, %v1121
        %1145 = vst.msk [vmem:[%s383 + $0x50] sm:$0xff] %vm1134, %v1123
        %1146 = vst.msk [vmem:[%s383 + $0x58] sm:$0xff] %vm1134, %v1125
        %1147 = vst.msk [vmem:[%s383 + $0x60] sm:$0xff] %vm1134, %v1127
        %1148 = vst.msk [vmem:[%s383 + $0x68] sm:$0xff] %vm1134, %v1129
        %1149 = vst.msk [vmem:[%s383 + $0x70] sm:$0xff] %vm1134, %v1131
        %1150 = vst.msk [vmem:[%s383 + $0x78] sm:$0xff] %vm1134, %v1133
        %s1151 = sand.u32 %s188, 1
        %s1152 = scalar_lea.sflag [#allocation4], %s1151
        %s1153 = sand.u32 %s188, 1
        %s1154 = smul.addr %s1153, 256
        %s1155 = scalar_lea.vmem [#allocation10], %s1154
        %s1156 = smul.u32 16, %s28
        %p1157 = scmp.lt.s32.totalorder %s1156, 63
        %s1158 = scalar_select %p1157, %s1156, 63
        %s1159 = smul.addr %s1158, 8
        %s1160 = scalar_lea.vmem %s8, %s1159
        // Predicated region
        $region65: #{tpu_custom_call.1} parent=47 // pred_check
          %p1161 = pneg %p198
        $region66: #{tpu_custom_call.1} parent=47 // pred_check_branch
          %1163 = sbr.rel (%p1161) target = $region68
        $region67: #{tpu_custom_call.1} parent=47 // pred_region
          %s1164 = smul.u32 16, %s28
          %s1166 = ssub.s32 4096, 4096
          %1167 = vsyncadd %s1152, %s1166
          %s1168 = smul.addr %s1164, 2
          %s1169 = smul.addr %s1168, 128
          %s1170 = scalar_lea.hbm %s7, %s1169
          %s1171 = sshll.u32 %s1155, 4
          %s1172 = int_to_ptr.vmem [resolvable:$true] %s1171
          %1177 = dma.vmem_to_hbm [thread:$0]  %s1172, 4096, %s1170, %s1152, 256, 256, 16
        $region68: #{tpu_custom_call.1} parent=47 // pred_fallthru
          _
        // Predicated region
        $region69: #{tpu_custom_call.1} parent=47 // pred_check
          %p1178 = pneg %p224
        $region70: #{tpu_custom_call.1} parent=47 // pred_check_branch
          %1180 = sbr.rel (%p1178) target = $region72
        $region71: #{tpu_custom_call.1} parent=47 // pred_region
          %s1181 = smul.u32 16, %s28
        $region72: #{tpu_custom_call.1} parent=47 // pred_fallthru
          _
      $region48: #{tpu_custom_call.1} parent=5 // pred_fallthru
        _
      %p1182 = scmp.le.s32.totalorder 2, %s23
      // Predicated region
      $region73: #{tpu_custom_call.1} parent=5 // pred_check
        %p1183 = pneg %p1182
      $region74: #{tpu_custom_call.1} parent=5 // pred_check_branch
        %1185 = sbr.rel (%p1183) target = $region76
      $region75: #{tpu_custom_call.1} parent=5 // pred_region
        %s1186 = ssub.s32 %s23, 2
        // Predicated region
        $region77: #{tpu_custom_call.1} parent=75 // pred_check
          %p1187 = pneg %p204
        $region78: #{tpu_custom_call.1} parent=75 // pred_check_branch
          %1189 = sbr.rel (%p1187) target = $region80
        $region79: #{tpu_custom_call.1} parent=75 // pred_region
          %s1190 = sand.u32 %s189, 1
          %s1191 = scalar_lea.sflag [#allocation4], %s1190
          %s1192 = sand.u32 %s189, 1
          %s1193 = smul.addr %s1192, 256
          %s1194 = scalar_lea.vmem [#allocation10], %s1193
          %1195 = dma.done %s1191, 4096
        $region80: #{tpu_custom_call.1} parent=75 // pred_fallthru
          _
        // Predicated region
        $region81: #{tpu_custom_call.1} parent=75 // pred_check
          %p1196 = pneg %p230
        $region82: #{tpu_custom_call.1} parent=75 // pred_check_branch
          %1198 = sbr.rel (%p1196) target = $region84
        $region83: #{tpu_custom_call.1} parent=75 // pred_region
          %s1199 = smul.u32 16, %s29
          %p1200 = scmp.lt.s32.totalorder %s1199, 63
          %s1201 = scalar_select %p1200, %s1199, 63
          %s1202 = smul.addr %s1201, 8
          %s1203 = scalar_lea.vmem %s8, %s1202
        $region84: #{tpu_custom_call.1} parent=75 // pred_fallthru
          _
      $region76: #{tpu_custom_call.1} parent=5 // pred_fallthru
        _
    $region6: #{tpu_custom_call.1} parent=1 // loop_footer
      %s27 = sadd.s32 1, %s23
    $region7: #{tpu_custom_call.1} parent=1 // loop_footer_branch
      %22 = sbr.rel target = $region3
    $region8: #{tpu_custom_call.1} parent=1 // loop_exit
      _
    %1204 = vsyncpa [#allocation3], 1
    %s1205 = scalar_lea.sflag [#allocation3], 1
    %1206 = vsyncpa %s1205, 1
    %1207 = vsyncpa [#allocation6], 1
    %1208 = vsyncpa [#allocation9], 1
    %1209 = vsyncpa [#allocation4], 1
    %s1210 = scalar_lea.sflag [#allocation4], 1
    %1211 = vsyncpa %s1210, 1

// kernel: tpu_custom_call.1
$region0: #{tpu_custom_call.1}
  #allocation0 [shape = 'u32[]', space=smem, size = 0x4, offset = 0x4, fixed_abs, tag = 'smem constant byte address 0x4 - core index']
  #allocation1 [shape = 'u32[144,128]{1,0:T(1,128)}', space=vmem, size = 0x12000, scoped, tag = 'internal scratch']
  %s0 = inlined_call_operand.hbm [shape: f32[512,256], index: 0, kind: input, shape index: {}]
  %s1 = inlined_call_operand.hbm [shape: f32[128,128], index: 1, kind: input, shape index: {}]
  %s2 = inlined_call_operand.vmem [shape: f32[1,128], index: 2, kind: input, shape index: {}]
  %s3 = inlined_call_operand.hbm [shape: f32[128,128], index: 3, kind: input, shape index: {}]
  %s4 = inlined_call_operand.vmem [shape: f32[1,128], index: 4, kind: input, shape index: {}]
  %s5 = inlined_call_operand.hbm [shape: f32[128,256], index: 5, kind: input, shape index: {}]
  %s6 = inlined_call_operand.vmem [shape: f32[1,256], index: 6, kind: input, shape index: {}]
  %s7 = inlined_call_operand.hbm [shape: f32[512,256], index: 7, kind: output, shape index: {0}]
  %s8 = inlined_call_operand.vmem [shape: f32[512,1], index: 8, kind: output, shape index: {1}]
  %9 = xla_tuple %s7, %s8
  %s10 = sld [smem:[#allocation0]]
  $region85: #{tpu_custom_call.1} parent=0
    _
  %s12 = ssub.s32 1, %s10
  %s13 = scalar_select 0, %s12, %s10
  $region1: #{tpu_custom_call.1} parent=0
    #allocation2 [shape = 'u8[262144]{0}', space=vmem, size = 0x40000, scoped, tag = 'input window, operand 0']
    #allocation3 [shape = 's32[2]{0}', space=sflag, size = 0x8, scoped, tag = 'scoped memory for tpu_custom_call.1']
    #allocation4 [shape = 's32[2]{0}', space=sflag, size = 0x8, scoped, tag = 'scoped memory for tpu_custom_call.1']
    #allocation5 [shape = 'u8[65536]{0}', space=vmem, size = 0x10000, scoped, tag = 'input window, operand 1, single buffered']
    #allocation6 [shape = 's32[1]{0}', space=sflag, size = 0x4, scoped, tag = 'scoped memory for tpu_custom_call.1']
    #allocation7 [shape = 'u8[65536]{0}', space=vmem, size = 0x10000, scoped, tag = 'input window, operand 3, single buffered']
    #allocation8 [shape = 'u8[131072]{0}', space=vmem, size = 0x20000, scoped, tag = 'input window, operand 5, single buffered']
    #allocation9 [shape = 's32[1]{0}', space=sflag, size = 0x4, scoped, tag = 'scoped memory for tpu_custom_call.1']
    #allocation10 [shape = 'u8[262144]{0}', space=vmem, size = 0x40000, scoped, tag = 'output window, operand 0']
    %14 = vsyncpa [#allocation3], 0
    %s15 = scalar_lea.sflag [#allocation3], 1
    %16 = vsyncpa %s15, 0
    %17 = vsyncpa [#allocation6], 0
    %18 = vsyncpa [#allocation9], 0
    %19 = vsyncpa [#allocation4], 0
    %s20 = scalar_lea.sflag [#allocation4], 1
    %21 = vsyncpa %s20, 0
    loop: start=0, step=1, limit=6
    $region2: #{tpu_custom_call.1} parent=1 // loop_pre_header
      _
    $region3: #{tpu_custom_call.1} parent=1 // loop_header
      %s23 = sphi 0, %s27
      %p24 = scmp.ge.s32.totalorder %s23, 6
      %s33 = sphi 0, %s35
      %s36 = sphi 0, %s33
      %s37 = sphi 0, %s36
      %s53 = sphi 0, %s37
      %s57 = sphi 0, %s57
      %s59 = sphi 0, %s57
      %s60 = sphi 0, %s59
      %s74 = sphi 0, %s60
      %s78 = sphi 0, %s78
      %s80 = sphi 0, %s78
      %s81 = sphi 0, %s80
      %s95 = sphi 0, %s81
      %s99 = sphi 0, %s99
      %s101 = sphi 0, %s99
      %s102 = sphi 0, %s101
      %s116 = sphi 0, %s102
      %s120 = sphi 0, %s120
      %s122 = sphi 0, %s120
      %s123 = sphi 0, %s122
      %s137 = sphi 0, %s123
      %s141 = sphi 0, %s141
      %s143 = sphi 0, %s141
      %s144 = sphi 0, %s143
      %s158 = sphi 0, %s144
      %s162 = sphi 0, %s162
      %s164 = sphi 0, %s162
      %s165 = sphi 0, %s164
      %s179 = sphi 0, %s165
      %s185 = sphi 0, %s187
      %s188 = sphi 0, %s185
      %s189 = sphi 0, %s188
      %s205 = sphi 0, %s189
      %s211 = sphi 0, %s213
      %s214 = sphi 0, %s211
      %s215 = sphi 0, %s214
      %s231 = sphi 0, %s215
    $region4: #{tpu_custom_call.1} parent=1 // loop_header_branch
      %26 = sbr.rel (%p24) target = $region8
    $region5: #{tpu_custom_call.1} parent=1 // loop_body
      %s28 = ssub.s32 %s23, 1
      %s29 = ssub.s32 %s23, 2
      %s30 = sadd.s32 %s23, 1
      %s31 = ssub.s32 %s23, %s30
      %p32 = scmp.eq.s32.totalorder %s31, 0
      %s34 = sadd.s32 %s33, 1
      %s35 = scalar_select %p32, %s33, %s34
      %p38 = pneg %p32
      %p39 = scmp.eq.s32.totalorder %s23, 3
      %p40 = por %p38, %p39
      %p41 = scmp.ne.s32.totalorder %s33, %s36
      %p42 = scmp.eq.s32.totalorder %s23, 0
      %p43 = por %p41, %p42
      %p44 = scmp.ne.s32.totalorder %s33, %s36
      %p45 = scmp.eq.s32.totalorder %s28, 3
      %p46 = por %p44, %p45
      %p47 = scmp.ne.s32.totalorder %s36, %s37
      %p48 = scmp.eq.s32.totalorder %s28, 0
      %p49 = por %p47, %p48
      %p50 = scmp.ne.s32.totalorder %s36, %s37
      %p51 = scmp.eq.s32.totalorder %s29, 3
      %p52 = por %p50, %p51
      %p54 = scmp.ne.s32.totalorder %s37, %s53
      %p55 = scmp.eq.s32.totalorder %s29, 0
      %p56 = por %p54, %p55
      %s58 = sadd.s32 %s57, 1
      %p61 = scmp.eq.s32.totalorder %s23, 3
      %p62 = scmp.ne.s32.totalorder %s57, %s59
      %p63 = scmp.eq.s32.totalorder %s23, 0
      %p64 = por %p62, %p63
      %p65 = scmp.ne.s32.totalorder %s57, %s59
      %p66 = scmp.eq.s32.totalorder %s28, 3
      %p67 = por %p65, %p66
      %p68 = scmp.ne.s32.totalorder %s59, %s60
      %p69 = scmp.eq.s32.totalorder %s28, 0
      %p70 = por %p68, %p69
      %p71 = scmp.ne.s32.totalorder %s59, %s60
      %p72 = scmp.eq.s32.totalorder %s29, 3
      %p73 = por %p71, %p72
      %p75 = scmp.ne.s32.totalorder %s60, %s74
      %p76 = scmp.eq.s32.totalorder %s29, 0
      %p77 = por %p75, %p76
      %s79 = sadd.s32 %s78, 1
      %p82 = scmp.eq.s32.totalorder %s23, 3
      %p83 = scmp.ne.s32.totalorder %s78, %s80
      %p84 = scmp.eq.s32.totalorder %s23, 0
      %p85 = por %p83, %p84
      %p86 = scmp.ne.s32.totalorder %s78, %s80
      %p87 = scmp.eq.s32.totalorder %s28, 3
      %p88 = por %p86, %p87
      %p89 = scmp.ne.s32.totalorder %s80, %s81
      %p90 = scmp.eq.s32.totalorder %s28, 0
      %p91 = por %p89, %p90
      %p92 = scmp.ne.s32.totalorder %s80, %s81
      %p93 = scmp.eq.s32.totalorder %s29, 3
      %p94 = por %p92, %p93
      %p96 = scmp.ne.s32.totalorder %s81, %s95
      %p97 = scmp.eq.s32.totalorder %s29, 0
      %p98 = por %p96, %p97
      %s100 = sadd.s32 %s99, 1
      %p103 = scmp.eq.s32.totalorder %s23, 3
      %p104 = scmp.ne.s32.totalorder %s99, %s101
      %p105 = scmp.eq.s32.totalorder %s23, 0
      %p106 = por %p104, %p105
      %p107 = scmp.ne.s32.totalorder %s99, %s101
      %p108 = scmp.eq.s32.totalorder %s28, 3
      %p109 = por %p107, %p108
      %p110 = scmp.ne.s32.totalorder %s101, %s102
      %p111 = scmp.eq.s32.totalorder %s28, 0
      %p112 = por %p110, %p111
      %p113 = scmp.ne.s32.totalorder %s101, %s102
      %p114 = scmp.eq.s32.totalorder %s29, 3
      %p115 = por %p113, %p114
      %p117 = scmp.ne.s32.totalorder %s102, %s116
      %p118 = scmp.eq.s32.totalorder %s29, 0
      %p119 = por %p117, %p118
      %s121 = sadd.s32 %s120, 1
      %p124 = scmp.eq.s32.totalorder %s23, 3
      %p125 = scmp.ne.s32.totalorder %s120, %s122
      %p126 = scmp.eq.s32.totalorder %s23, 0
      %p127 = por %p125, %p126
      %p128 = scmp.ne.s32.totalorder %s120, %s122
      %p129 = scmp.eq.s32.totalorder %s28, 3
      %p130 = por %p128, %p129
      %p131 = scmp.ne.s32.totalorder %s122, %s123
      %p132 = scmp.eq.s32.totalorder %s28, 0
      %p133 = por %p131, %p132
      %p134 = scmp.ne.s32.totalorder %s122, %s123
      %p135 = scmp.eq.s32.totalorder %s29, 3
      %p136 = por %p134, %p135
      %p138 = scmp.ne.s32.totalorder %s123, %s137
      %p139 = scmp.eq.s32.totalorder %s29, 0
      %p140 = por %p138, %p139
      %s142 = sadd.s32 %s141, 1
      %p145 = scmp.eq.s32.totalorder %s23, 3
      %p146 = scmp.ne.s32.totalorder %s141, %s143
      %p147 = scmp.eq.s32.totalorder %s23, 0
      %p148 = por %p146, %p147
      %p149 = scmp.ne.s32.totalorder %s141, %s143
      %p150 = scmp.eq.s32.totalorder %s28, 3
      %p151 = por %p149, %p150
      %p152 = scmp.ne.s32.totalorder %s143, %s144
      %p153 = scmp.eq.s32.totalorder %s28, 0
      %p154 = por %p152, %p153
      %p155 = scmp.ne.s32.totalorder %s143, %s144
      %p156 = scmp.eq.s32.totalorder %s29, 3
      %p157 = por %p155, %p156
      %p159 = scmp.ne.s32.totalorder %s144, %s158
      %p160 = scmp.eq.s32.totalorder %s29, 0
      %p161 = por %p159, %p160
      %s163 = sadd.s32 %s162, 1
      %p166 = scmp.eq.s32.totalorder %s23, 3
      %p167 = scmp.ne.s32.totalorder %s162, %s164
      %p168 = scmp.eq.s32.totalorder %s23, 0
      %p169 = por %p167, %p168
      %p170 = scmp.ne.s32.totalorder %s162, %s164
      %p171 = scmp.eq.s32.totalorder %s28, 3
      %p172 = por %p170, %p171
      %p173 = scmp.ne.s32.totalorder %s164, %s165
      %p174 = scmp.eq.s32.totalorder %s28, 0
      %p175 = por %p173, %p174
      %p176 = scmp.ne.s32.totalorder %s164, %s165
      %p177 = scmp.eq.s32.totalorder %s29, 3
      %p178 = por %p176, %p177
      %p180 = scmp.ne.s32.totalorder %s165, %s179
      %p181 = scmp.eq.s32.totalorder %s29, 0
      %p182 = por %p180, %p181
      %s183 = ssub.s32 %s23, %s30
      %p184 = scmp.eq.s32.totalorder %s183, 0
      %s186 = sadd.s32 %s185, 1
      %s187 = scalar_select %p184, %s185, %s186
      %p190 = pneg %p184
      %p191 = scmp.eq.s32.totalorder %s23, 3
      %p192 = por %p190, %p191
      %p193 = scmp.ne.s32.totalorder %s185, %s188
      %p194 = scmp.eq.s32.totalorder %s23, 0
      %p195 = por %p193, %p194
      %p196 = scmp.ne.s32.totalorder %s185, %s188
      %p197 = scmp.eq.s32.totalorder %s28, 3
      %p198 = por %p196, %p197
      %p199 = scmp.ne.s32.totalorder %s188, %s189
      %p200 = scmp.eq.s32.totalorder %s28, 0
      %p201 = por %p199, %p200
      %p202 = scmp.ne.s32.totalorder %s188, %s189
      %p203 = scmp.eq.s32.totalorder %s29, 3
      %p204 = por %p202, %p203
      %p206 = scmp.ne.s32.totalorder %s189, %s205
      %p207 = scmp.eq.s32.totalorder %s29, 0
      %p208 = por %p206, %p207
      %s209 = ssub.s32 %s23, %s30
      %p210 = scmp.eq.s32.totalorder %s209, 0
      %s212 = sadd.s32 %s211, 1
      %s213 = scalar_select %p210, %s211, %s212
      %p216 = pneg %p210
      %p217 = scmp.eq.s32.totalorder %s23, 3
      %p218 = por %p216, %p217
      %p219 = scmp.ne.s32.totalorder %s211, %s214
      %p220 = scmp.eq.s32.totalorder %s23, 0
      %p221 = por %p219, %p220
      %p222 = scmp.ne.s32.totalorder %s211, %s214
      %p223 = scmp.eq.s32.totalorder %s28, 3
      %p224 = por %p222, %p223
      %p225 = scmp.ne.s32.totalorder %s214, %s215
      %p226 = scmp.eq.s32.totalorder %s28, 0
      %p227 = por %p225, %p226
      %p228 = scmp.ne.s32.totalorder %s214, %s215
      %p229 = scmp.eq.s32.totalorder %s29, 3
      %p230 = por %p228, %p229
      %p232 = scmp.ne.s32.totalorder %s215, %s231
      %p233 = scmp.eq.s32.totalorder %s29, 0
      %p234 = por %p232, %p233
      %p235 = scmp.le.s32.totalorder 1, %s23
      %p236 = scmp.lt.s32.totalorder %s23, 5
      %p237 = pnand %p235, %p236
      %p238 = pneg %p237
      // Predicated region
      $region9: #{tpu_custom_call.1} parent=5 // pred_check
        _
      $region10: #{tpu_custom_call.1} parent=5 // pred_check_branch
        %240 = sbr.rel (%p237) target = $region12
      $region11: #{tpu_custom_call.1} parent=5 // pred_region
        %s241 = ssub.s32 %s23, 1
        // Predicated region
        $region13: #{tpu_custom_call.1} parent=11 // pred_check
          %p242 = pneg %p70
        $region14: #{tpu_custom_call.1} parent=11 // pred_check_branch
          %244 = sbr.rel (%p242) target = $region16
        $region15: #{tpu_custom_call.1} parent=11 // pred_region
          %s246 = ssub.s32 2048, 2048
          %247 = vsyncadd [#allocation6], %s246
          %s248 = sshll.u32 [#allocation5], 4
          %s249 = int_to_ptr.vmem [resolvable:$true] %s248
          %254 = dma.hbm_to_vmem [thread:$0]  %s1, 2048, %s249, [#allocation6], 128, 128, 8
        $region16: #{tpu_custom_call.1} parent=11 // pred_fallthru
          _
        // Predicated region
        $region17: #{tpu_custom_call.1} parent=11 // pred_check
          %p255 = pneg %p91
        $region18: #{tpu_custom_call.1} parent=11 // pred_check_branch
          %257 = sbr.rel (%p255) target = $region20
        $region19: #{tpu_custom_call.1} parent=11 // pred_region
          _
        $region20: #{tpu_custom_call.1} parent=11 // pred_fallthru
          _
        // Predicated region
        $region21: #{tpu_custom_call.1} parent=11 // pred_check
          %p258 = pneg %p112
        $region22: #{tpu_custom_call.1} parent=11 // pred_check_branch
          %260 = sbr.rel (%p258) target = $region24
        $region23: #{tpu_custom_call.1} parent=11 // pred_region
          %s262 = ssub.s32 2048, 2048
          %263 = vsyncadd [#allocation6], %s262
          %s264 = sshll.u32 [#allocation7], 4
          %s265 = int_to_ptr.vmem [resolvable:$true] %s264
          %270 = dma.hbm_to_vmem [thread:$0]  %s3, 2048, %s265, [#allocation6], 128, 128, 8
        $region24: #{tpu_custom_call.1} parent=11 // pred_fallthru
          _
        // Predicated region
        $region25: #{tpu_custom_call.1} parent=11 // pred_check
          %p271 = pneg %p133
        $region26: #{tpu_custom_call.1} parent=11 // pred_check_branch
          %273 = sbr.rel (%p271) target = $region28
        $region27: #{tpu_custom_call.1} parent=11 // pred_region
          _
        $region28: #{tpu_custom_call.1} parent=11 // pred_fallthru
          _
        // Predicated region
        $region29: #{tpu_custom_call.1} parent=11 // pred_check
          %p274 = pneg %p154
        $region30: #{tpu_custom_call.1} parent=11 // pred_check_branch
          %276 = sbr.rel (%p274) target = $region32
        $region31: #{tpu_custom_call.1} parent=11 // pred_region
          %s278 = ssub.s32 4096, 4096
          %279 = vsyncadd [#allocation9], %s278
          %s280 = sshll.u32 [#allocation8], 4
          %s281 = int_to_ptr.vmem [resolvable:$true] %s280
          %286 = dma.hbm_to_vmem [thread:$0]  %s5, 4096, %s281, [#allocation9], 256, 256, 16
        $region32: #{tpu_custom_call.1} parent=11 // pred_fallthru
          _
        // Predicated region
        $region33: #{tpu_custom_call.1} parent=11 // pred_check
          %p287 = pneg %p175
        $region34: #{tpu_custom_call.1} parent=11 // pred_check_branch
          %289 = sbr.rel (%p287) target = $region36
        $region35: #{tpu_custom_call.1} parent=11 // pred_region
          _
        $region36: #{tpu_custom_call.1} parent=11 // pred_fallthru
          _
      $region12: #{tpu_custom_call.1} parent=5 // pred_fallthru
        _
      %p290 = scmp.lt.s32.totalorder %s23, 4
      // Predicated region
      $region37: #{tpu_custom_call.1} parent=5 // pred_check
        %p291 = pneg %p290
      $region38: #{tpu_custom_call.1} parent=5 // pred_check_branch
        %293 = sbr.rel (%p291) target = $region40
      $region39: #{tpu_custom_call.1} parent=5 // pred_region
        // Predicated region
        $region41: #{tpu_custom_call.1} parent=39 // pred_check
          %p294 = pneg %p43
        $region42: #{tpu_custom_call.1} parent=39 // pred_check_branch
          %296 = sbr.rel (%p294) target = $region44
        $region43: #{tpu_custom_call.1} parent=39 // pred_region
          %s297 = sand.u32 %s33, 1
          %s298 = scalar_lea.sflag [#allocation3], %s297
          %s299 = sand.u32 %s33, 1
          %s300 = smul.addr %s299, 256
          %s301 = scalar_lea.vmem [#allocation2], %s300
          %s302 = smul.u32 16, %s23
          %s304 = ssub.s32 4096, 4096
          %305 = vsyncadd %s298, %s304
          %s306 = smul.addr %s302, 2
          %s307 = smul.addr %s306, 128
          %s308 = scalar_lea.hbm %s0, %s307
          %s309 = sshll.u32 %s301, 4
          %s310 = int_to_ptr.vmem [resolvable:$true] %s309
          %315 = dma.hbm_to_vmem [thread:$0]  %s308, 4096, %s310, %s298, 256, 256, 16
        $region44: #{tpu_custom_call.1} parent=39 // pred_fallthru
          _
      $region40: #{tpu_custom_call.1} parent=5 // pred_fallthru
        _
      %p316 = scmp.le.s32.totalorder 1, %s23
      %p317 = scmp.lt.s32.totalorder %s23, 5
      %p318 = pnand %p316, %p317
      %p319 = pneg %p318
      // Predicated region
      $region45: #{tpu_custom_call.1} parent=5 // pred_check
        _
      $region46: #{tpu_custom_call.1} parent=5 // pred_check_branch
        %321 = sbr.rel (%p318) target = $region48
      $region47: #{tpu_custom_call.1} parent=5 // pred_region
        %s322 = ssub.s32 %s23, 1
        %s323 = sand.u32 %s36, 1
        %s324 = scalar_lea.sflag [#allocation3], %s323
        %s325 = sand.u32 %s36, 1
        %s326 = smul.addr %s325, 256
        %s327 = scalar_lea.vmem [#allocation2], %s326
        // Predicated region
        $region49: #{tpu_custom_call.1} parent=47 // pred_check
          %p328 = pneg %p49
        $region50: #{tpu_custom_call.1} parent=47 // pred_check_branch
          %330 = sbr.rel (%p328) target = $region52
        $region51: #{tpu_custom_call.1} parent=47 // pred_region
          %331 = dma.done %s324, 4096
        $region52: #{tpu_custom_call.1} parent=47 // pred_fallthru
          _
        // Predicated region
        $region53: #{tpu_custom_call.1} parent=47 // pred_check
          %p332 = pneg %p70
        $region54: #{tpu_custom_call.1} parent=47 // pred_check_branch
          %334 = sbr.rel (%p332) target = $region56
        $region55: #{tpu_custom_call.1} parent=47 // pred_region
          %335 = dma.done [#allocation6], 2048
        $region56: #{tpu_custom_call.1} parent=47 // pred_fallthru
          _
        // Predicated region
        $region57: #{tpu_custom_call.1} parent=47 // pred_check
          %p336 = pneg %p112
        $region58: #{tpu_custom_call.1} parent=47 // pred_check_branch
          %338 = sbr.rel (%p336) target = $region60
        $region59: #{tpu_custom_call.1} parent=47 // pred_region
          %339 = dma.done [#allocation6], 2048
        $region60: #{tpu_custom_call.1} parent=47 // pred_fallthru
          _
        // Predicated region
        $region61: #{tpu_custom_call.1} parent=47 // pred_check
          %p340 = pneg %p154
        $region62: #{tpu_custom_call.1} parent=47 // pred_check_branch
          %342 = sbr.rel (%p340) target = $region64
        $region63: #{tpu_custom_call.1} parent=47 // pred_region
          %343 = dma.done [#allocation9], 4096
        $region64: #{tpu_custom_call.1} parent=47 // pred_fallthru
          _
        %s344 = sand.u32 %s36, 1
        %s345 = scalar_lea.sflag [#allocation3], %s344
        %s346 = sand.u32 %s36, 1
        %s347 = smul.addr %s346, 256
        %s348 = scalar_lea.vmem [#allocation2], %s347
        %p349 = pneg %p49
        %p350 = pneg %p46
        %p351 = pneg %p70
        %p352 = pneg %p67
        %p353 = pneg %p91
        %p354 = pneg %p88
        %p355 = pneg %p112
        %p356 = pneg %p109
        %p357 = pneg %p133
        %p358 = pneg %p130
        %p359 = pneg %p154
        %p360 = pneg %p151
        %p361 = pneg %p175
        %p362 = pneg %p172
        %p363 = pneg %p201
        %p364 = pneg %p198
        %s365 = sand.u32 %s188, 1
        %s366 = scalar_lea.sflag [#allocation4], %s365
        %s367 = sand.u32 %s188, 1
        %s368 = smul.addr %s367, 256
        %s369 = scalar_lea.vmem [#allocation10], %s368
        %p370 = pneg %p227
        %p371 = pneg %p224
        %s372 = smul.u32 16, %s28
        %p373 = scmp.lt.s32.totalorder %s372, 63
        %s374 = scalar_select %p373, %s372, 63
        %s375 = smul.addr %s374, 8
        %s376 = scalar_lea.vmem %s8, %s375
        %s377 = smul.u32 16, %s28
        %s378 = smul.u32 16, %s28
        %s379 = smul.u32 16, %s28
        %p380 = scmp.lt.s32.totalorder %s379, 63
        %s381 = scalar_select %p380, %s379, 63
        %s382 = smul.addr %s381, 8
        %s383 = scalar_lea.vmem %s8, %s382
        %s384 = smul.u32 16, %s28
        %v385 = vld [vmem:[%s327] sm:$0xff]
        %v386 = vld [vmem:[%s327 + $0x10] sm:$0xff]
        %v387 = vld [vmem:[%s327 + $0x20] sm:$0xff]
        %v388 = vld [vmem:[%s327 + $0x30] sm:$0xff]
        %v389 = vld [vmem:[%s327 + $0x40] sm:$0xff]
        %v390 = vld [vmem:[%s327 + $0x50] sm:$0xff]
        %v391 = vld [vmem:[%s327 + $0x60] sm:$0xff]
        %v392 = vld [vmem:[%s327 + $0x70] sm:$0xff]
        %v393 = vld [vmem:[%s327 + $0x80] sm:$0xff]
        %v394 = vld [vmem:[%s327 + $0x90] sm:$0xff]
        %v395 = vld [vmem:[%s327 + $0xa0] sm:$0xff]
        %v396 = vld [vmem:[%s327 + $0xb0] sm:$0xff]
        %v397 = vld [vmem:[%s327 + $0xc0] sm:$0xff]
        %v398 = vld [vmem:[%s327 + $0xd0] sm:$0xff]
        %v399 = vld [vmem:[%s327 + $0xe0] sm:$0xff]
        %v400 = vld [vmem:[%s327 + $0xf0] sm:$0xff]
        %v401 = vld [vmem:[%s327 + $0x8] sm:$0xff]
        %v402 = vld [vmem:[%s327 + $0x18] sm:$0xff]
        %v403 = vld [vmem:[%s327 + $0x28] sm:$0xff]
        %v404 = vld [vmem:[%s327 + $0x38] sm:$0xff]
        %v405 = vld [vmem:[%s327 + $0x48] sm:$0xff]
        %v406 = vld [vmem:[%s327 + $0x58] sm:$0xff]
        %v407 = vld [vmem:[%s327 + $0x68] sm:$0xff]
        %v408 = vld [vmem:[%s327 + $0x78] sm:$0xff]
        %v409 = vld [vmem:[%s327 + $0x88] sm:$0xff]
        %v410 = vld [vmem:[%s327 + $0x98] sm:$0xff]
        %v411 = vld [vmem:[%s327 + $0xa8] sm:$0xff]
        %v412 = vld [vmem:[%s327 + $0xb8] sm:$0xff]
        %v413 = vld [vmem:[%s327 + $0xc8] sm:$0xff]
        %v414 = vld [vmem:[%s327 + $0xd8] sm:$0xff]
        %v415 = vld [vmem:[%s327 + $0xe8] sm:$0xff]
        %v416 = vld [vmem:[%s327 + $0xf8] sm:$0xff]
        %v417 = vld [vmem:[#allocation5] sm:$0xff]
        %v418 = vld [vmem:[#allocation5 + $0x8] sm:$0xff]
        %v419 = vld [vmem:[#allocation5 + $0x10] sm:$0xff]
        %v420 = vld [vmem:[#allocation5 + $0x18] sm:$0xff]
        %v421 = vld [vmem:[#allocation5 + $0x20] sm:$0xff]
        %v422 = vld [vmem:[#allocation5 + $0x28] sm:$0xff]
        %v423 = vld [vmem:[#allocation5 + $0x30] sm:$0xff]
        %v424 = vld [vmem:[#allocation5 + $0x38] sm:$0xff]
        %v425 = vld [vmem:[#allocation5 + $0x40] sm:$0xff]
        %v426 = vld [vmem:[#allocation5 + $0x48] sm:$0xff]
        %v427 = vld [vmem:[#allocation5 + $0x50] sm:$0xff]
        %v428 = vld [vmem:[#allocation5 + $0x58] sm:$0xff]
        %v429 = vld [vmem:[#allocation5 + $0x60] sm:$0xff]
        %v430 = vld [vmem:[#allocation5 + $0x68] sm:$0xff]
        %v431 = vld [vmem:[#allocation5 + $0x70] sm:$0xff]
        %v432 = vld [vmem:[#allocation5 + $0x78] sm:$0xff]
        %v433 = vld [vmem:[%s2] sm:$0x1]
        %v435 = vlaneseq
        %v436 = vshrl.u32 %v435, 7
        %v437 = vsub.s32 0, %v436
        %v438 = vrot.slane %v433, %v437
        %440 = vmatprep.subr.mxu0 0.0
        %441 = vmatpush1.msra.mxu0 %v432
        %442 = vmatprep.subr.mxu0 0.0
        %443 = vmatpush1.msra.mxu0 %v431
        %444 = vmatprep.subr.mxu0 0.0
        %445 = vmatpush1.msra.mxu0 %v430
        %446 = vmatprep.subr.mxu0 0.0
        %447 = vmatpush1.msra.mxu0 %v429
        %448 = vmatprep.subr.mxu0 0.0
        %449 = vmatpush1.msra.mxu0 %v428
        %450 = vmatprep.subr.mxu0 0.0
        %451 = vmatpush1.msra.mxu0 %v427
        %452 = vmatprep.subr.mxu0 0.0
        %453 = vmatpush1.msra.mxu0 %v426
        %454 = vmatprep.subr.mxu0 0.0
        %455 = vmatpush1.msra.mxu0 %v425
        %456 = vmatprep.subr.mxu0 0.0
        %457 = vmatpush1.msra.mxu0 %v424
        %458 = vmatprep.subr.mxu0 0.0
        %459 = vmatpush1.msra.mxu0 %v423
        %460 = vmatprep.subr.mxu0 0.0
        %461 = vmatpush1.msra.mxu0 %v422
        %462 = vmatprep.subr.mxu0 0.0
        %463 = vmatpush1.msra.mxu0 %v421
        %464 = vmatprep.subr.mxu0 0.0
        %465 = vmatpush1.msra.mxu0 %v420
        %466 = vmatprep.subr.mxu0 0.0
        %467 = vmatpush1.msra.mxu0 %v419
        %468 = vmatprep.subr.mxu0 0.0
        %469 = vmatpush1.msra.mxu0 %v418
        %470 = vmatprep.subr.mxu0 0.0
        %471 = vmatpush1.msra.mxu0 %v417
        %472 = vmatprep.subr.mxu0 0.0
        %473 = vmatpush2.msra.mxu0 0.0
        %474 = vmatprep.subr.mxu0 0.0
        %475 = vmatpush2.msra.mxu0 0.0
        %476 = vmatprep.subr.mxu0 0.0
        %477 = vmatpush2.msra.mxu0 0.0
        %478 = vmatprep.subr.mxu0 0.0
        %479 = vmatpush2.msra.mxu0 0.0
        %480 = vmatprep.subr.mxu0 0.0
        %481 = vmatpush2.msra.mxu0 0.0
        %482 = vmatprep.subr.mxu0 0.0
        %483 = vmatpush2.msra.mxu0 0.0
        %484 = vmatprep.subr.mxu0 0.0
        %485 = vmatpush2.msra.mxu0 0.0
        %486 = vmatprep.subr.mxu0 0.0
        %487 = vmatpush2.msra.mxu0 0.0
        %488 = vmatprep.subr.mxu0 0.0
        %489 = vmatpush2.msra.mxu0 0.0
        %490 = vmatprep.subr.mxu0 0.0
        %491 = vmatpush2.msra.mxu0 0.0
        %492 = vmatprep.subr.mxu0 0.0
        %493 = vmatpush2.msra.mxu0 0.0
        %494 = vmatprep.subr.mxu0 0.0
        %495 = vmatpush2.msra.mxu0 0.0
        %496 = vmatprep.subr.mxu0 0.0
        %497 = vmatpush2.msra.mxu0 0.0
        %498 = vmatprep.subr.mxu0 0.0
        %499 = vmatpush2.msra.mxu0 0.0
        %500 = vmatprep.subr.mxu0 0.0
        %501 = vmatpush2.msra.mxu0 0.0
        %502 = vmatprep.subr.mxu0 0.0
        %503 = vmatpush2.msra.mxu0 0.0
        %504 = vmatprep.mubr.f32.mxu0 0.0
        %505 = vmatmul.mubr.f32.gmra.mxu0 %v385
        %v506 = vpop.f32.mrf.mxu0
        %v507 = vadd.f32 %v438, %v506
        %v508 = vpop.f32.mrf.mxu0
        %509 = vmatprep.mubr.f32.mxu0 0.0
        %510 = vmatmul.mubr.f32.gmra.mxu0 %v386
        %v511 = vpop.f32.mrf.mxu0
        %v512 = vadd.f32 %v438, %v511
        %v513 = vpop.f32.mrf.mxu0
        %514 = vmatprep.mubr.f32.mxu0 0.0
        %515 = vmatmul.mubr.f32.gmra.mxu0 %v387
        %v516 = vpop.f32.mrf.mxu0
        %v517 = vadd.f32 %v438, %v516
        %v518 = vpop.f32.mrf.mxu0
        %519 = vmatprep.mubr.f32.mxu0 0.0
        %520 = vmatmul.mubr.f32.gmra.mxu0 %v388
        %v521 = vpop.f32.mrf.mxu0
        %v522 = vadd.f32 %v438, %v521
        %v523 = vpop.f32.mrf.mxu0
        %524 = vmatprep.mubr.f32.mxu0 0.0
        %525 = vmatmul.mubr.f32.gmra.mxu0 %v389
        %v526 = vpop.f32.mrf.mxu0
        %v527 = vadd.f32 %v438, %v526
        %v528 = vpop.f32.mrf.mxu0
        %529 = vmatprep.mubr.f32.mxu0 0.0
        %530 = vmatmul.mubr.f32.gmra.mxu0 %v390
        %v531 = vpop.f32.mrf.mxu0
        %v532 = vadd.f32 %v438, %v531
        %v533 = vpop.f32.mrf.mxu0
        %534 = vmatprep.mubr.f32.mxu0 0.0
        %535 = vmatmul.mubr.f32.gmra.mxu0 %v391
        %v536 = vpop.f32.mrf.mxu0
        %v537 = vadd.f32 %v438, %v536
        %v538 = vpop.f32.mrf.mxu0
        %539 = vmatprep.mubr.f32.mxu0 0.0
        %540 = vmatmul.mubr.f32.gmra.mxu0 %v392
        %v541 = vpop.f32.mrf.mxu0
        %v542 = vadd.f32 %v438, %v541
        %v543 = vpop.f32.mrf.mxu0
        %544 = vmatprep.mubr.f32.mxu0 0.0
        %545 = vmatmul.mubr.f32.gmra.mxu0 %v393
        %v546 = vpop.f32.mrf.mxu0
        %v547 = vadd.f32 %v438, %v546
        %v548 = vpop.f32.mrf.mxu0
        %549 = vmatprep.mubr.f32.mxu0 0.0
        %550 = vmatmul.mubr.f32.gmra.mxu0 %v394
        %v551 = vpop.f32.mrf.mxu0
        %v552 = vadd.f32 %v438, %v551
        %v553 = vpop.f32.mrf.mxu0
        %554 = vmatprep.mubr.f32.mxu0 0.0
        %555 = vmatmul.mubr.f32.gmra.mxu0 %v395
        %v556 = vpop.f32.mrf.mxu0
        %v557 = vadd.f32 %v438, %v556
        %v558 = vpop.f32.mrf.mxu0
        %559 = vmatprep.mubr.f32.mxu0 0.0
        %560 = vmatmul.mubr.f32.gmra.mxu0 %v396
        %v561 = vpop.f32.mrf.mxu0
        %v562 = vadd.f32 %v438, %v561
        %v563 = vpop.f32.mrf.mxu0
        %564 = vmatprep.mubr.f32.mxu0 0.0
        %565 = vmatmul.mubr.f32.gmra.mxu0 %v397
        %v566 = vpop.f32.mrf.mxu0
        %v567 = vadd.f32 %v438, %v566
        %v568 = vpop.f32.mrf.mxu0
        %569 = vmatprep.mubr.f32.mxu0 0.0
        %570 = vmatmul.mubr.f32.gmra.mxu0 %v398
        %v571 = vpop.f32.mrf.mxu0
        %v572 = vadd.f32 %v438, %v571
        %v573 = vpop.f32.mrf.mxu0
        %574 = vmatprep.mubr.f32.mxu0 0.0
        %575 = vmatmul.mubr.f32.gmra.mxu0 %v399
        %v576 = vpop.f32.mrf.mxu0
        %v577 = vadd.f32 %v438, %v576
        %v578 = vpop.f32.mrf.mxu0
        %579 = vmatprep.mubr.f32.mxu0 0.0
        %580 = vmatmul.mubr.f32.gmra.mxu0 %v400
        %v581 = vpop.f32.mrf.mxu0
        %v582 = vadd.f32 %v438, %v581
        %v583 = vpop.f32.mrf.mxu0
        %584 = vdwg.mxu0
        %v585 = vmax.f32 %v507, 0.0
        %v586 = vmax.f32 %v512, 0.0
        %v587 = vmax.f32 %v517, 0.0
        %v588 = vmax.f32 %v522, 0.0
        %v589 = vmax.f32 %v527, 0.0
        %v590 = vmax.f32 %v532, 0.0
        %v591 = vmax.f32 %v537, 0.0
        %v592 = vmax.f32 %v542, 0.0
        %v593 = vmax.f32 %v547, 0.0
        %v594 = vmax.f32 %v552, 0.0
        %v595 = vmax.f32 %v557, 0.0
        %v596 = vmax.f32 %v562, 0.0
        %v597 = vmax.f32 %v567, 0.0
        %v598 = vmax.f32 %v572, 0.0
        %v599 = vmax.f32 %v577, 0.0
        %v600 = vmax.f32 %v582, 0.0
        %v601 = vld [vmem:[#allocation7] sm:$0xff]
        %v602 = vld [vmem:[#allocation7 + $0x8] sm:$0xff]
        %v603 = vld [vmem:[#allocation7 + $0x10] sm:$0xff]
        %v604 = vld [vmem:[#allocation7 + $0x18] sm:$0xff]
        %v605 = vld [vmem:[#allocation7 + $0x20] sm:$0xff]
        %v606 = vld [vmem:[#allocation7 + $0x28] sm:$0xff]
        %v607 = vld [vmem:[#allocation7 + $0x30] sm:$0xff]
        %v608 = vld [vmem:[#allocation7 + $0x38] sm:$0xff]
        %v609 = vld [vmem:[#allocation7 + $0x40] sm:$0xff]
        %v610 = vld [vmem:[#allocation7 + $0x48] sm:$0xff]
        %v611 = vld [vmem:[#allocation7 + $0x50] sm:$0xff]
        %v612 = vld [vmem:[#allocation7 + $0x58] sm:$0xff]
        %v613 = vld [vmem:[#allocation7 + $0x60] sm:$0xff]
        %v614 = vld [vmem:[#allocation7 + $0x68] sm:$0xff]
        %v615 = vld [vmem:[#allocation7 + $0x70] sm:$0xff]
        %v616 = vld [vmem:[#allocation7 + $0x78] sm:$0xff]
        %v617 = vld [vmem:[%s4] sm:$0x1]
        %v619 = vlaneseq
        %v620 = vshrl.u32 %v619, 7
        %v621 = vsub.s32 0, %v620
        %v622 = vrot.slane %v617, %v621
        %624 = vmatprep.subr.mxu0 0.0
        %625 = vmatpush1.msra.mxu0 %v616
        %626 = vmatprep.subr.mxu0 0.0
        %627 = vmatpush1.msra.mxu0 %v615
        %628 = vmatprep.subr.mxu0 0.0
        %629 = vmatpush1.msra.mxu0 %v614
        %630 = vmatprep.subr.mxu0 0.0
        %631 = vmatpush1.msra.mxu0 %v613
        %632 = vmatprep.subr.mxu0 0.0
        %633 = vmatpush1.msra.mxu0 %v612
        %634 = vmatprep.subr.mxu0 0.0
        %635 = vmatpush1.msra.mxu0 %v611
        %636 = vmatprep.subr.mxu0 0.0
        %637 = vmatpush1.msra.mxu0 %v610
        %638 = vmatprep.subr.mxu0 0.0
        %639 = vmatpush1.msra.mxu0 %v609
        %640 = vmatprep.subr.mxu0 0.0
        %641 = vmatpush1.msra.mxu0 %v608
        %642 = vmatprep.subr.mxu0 0.0
        %643 = vmatpush1.msra.mxu0 %v607
        %644 = vmatprep.subr.mxu0 0.0
        %645 = vmatpush1.msra.mxu0 %v606
        %646 = vmatprep.subr.mxu0 0.0
        %647 = vmatpush1.msra.mxu0 %v605
        %648 = vmatprep.subr.mxu0 0.0
        %649 = vmatpush1.msra.mxu0 %v604
        %650 = vmatprep.subr.mxu0 0.0
        %651 = vmatpush1.msra.mxu0 %v603
        %652 = vmatprep.subr.mxu0 0.0
        %653 = vmatpush1.msra.mxu0 %v602
        %654 = vmatprep.subr.mxu0 0.0
        %655 = vmatpush1.msra.mxu0 %v601
        %656 = vmatprep.subr.mxu0 0.0
        %657 = vmatpush2.msra.mxu0 0.0
        %658 = vmatprep.subr.mxu0 0.0
        %659 = vmatpush2.msra.mxu0 0.0
        %660 = vmatprep.subr.mxu0 0.0
        %661 = vmatpush2.msra.mxu0 0.0
        %662 = vmatprep.subr.mxu0 0.0
        %663 = vmatpush2.msra.mxu0 0.0
        %664 = vmatprep.subr.mxu0 0.0
        %665 = vmatpush2.msra.mxu0 0.0
        %666 = vmatprep.subr.mxu0 0.0
        %667 = vmatpush2.msra.mxu0 0.0
        %668 = vmatprep.subr.mxu0 0.0
        %669 = vmatpush2.msra.mxu0 0.0
        %670 = vmatprep.subr.mxu0 0.0
        %671 = vmatpush2.msra.mxu0 0.0
        %672 = vmatprep.subr.mxu0 0.0
        %673 = vmatpush2.msra.mxu0 0.0
        %674 = vmatprep.subr.mxu0 0.0
        %675 = vmatpush2.msra.mxu0 0.0
        %676 = vmatprep.subr.mxu0 0.0
        %677 = vmatpush2.msra.mxu0 0.0
        %678 = vmatprep.subr.mxu0 0.0
        %679 = vmatpush2.msra.mxu0 0.0
        %680 = vmatprep.subr.mxu0 0.0
        %681 = vmatpush2.msra.mxu0 0.0
        %682 = vmatprep.subr.mxu0 0.0
        %683 = vmatpush2.msra.mxu0 0.0
        %684 = vmatprep.subr.mxu0 0.0
        %685 = vmatpush2.msra.mxu0 0.0
        %686 = vmatprep.subr.mxu0 0.0
        %687 = vmatpush2.msra.mxu0 0.0
        %688 = vmatprep.mubr.f32.mxu0 0.0
        %689 = vmatmul.mubr.f32.gmra.mxu0 %v585
        %v690 = vpop.f32.mrf.mxu0
        %v691 = vadd.f32 %v622, %v690
        %v692 = vpop.f32.mrf.mxu0
        %693 = vmatprep.mubr.f32.mxu0 0.0
        %694 = vmatmul.mubr.f32.gmra.mxu0 %v586
        %v695 = vpop.f32.mrf.mxu0
        %v696 = vadd.f32 %v622, %v695
        %v697 = vpop.f32.mrf.mxu0
        %698 = vmatprep.mubr.f32.mxu0 0.0
        %699 = vmatmul.mubr.f32.gmra.mxu0 %v587
        %v700 = vpop.f32.mrf.mxu0
        %v701 = vadd.f32 %v622, %v700
        %v702 = vpop.f32.mrf.mxu0
        %703 = vmatprep.mubr.f32.mxu0 0.0
        %704 = vmatmul.mubr.f32.gmra.mxu0 %v588
        %v705 = vpop.f32.mrf.mxu0
        %v706 = vadd.f32 %v622, %v705
        %v707 = vpop.f32.mrf.mxu0
        %708 = vmatprep.mubr.f32.mxu0 0.0
        %709 = vmatmul.mubr.f32.gmra.mxu0 %v589
        %v710 = vpop.f32.mrf.mxu0
        %v711 = vadd.f32 %v622, %v710
        %v712 = vpop.f32.mrf.mxu0
        %713 = vmatprep.mubr.f32.mxu0 0.0
        %714 = vmatmul.mubr.f32.gmra.mxu0 %v590
        %v715 = vpop.f32.mrf.mxu0
        %v716 = vadd.f32 %v622, %v715
        %v717 = vpop.f32.mrf.mxu0
        %718 = vmatprep.mubr.f32.mxu0 0.0
        %719 = vmatmul.mubr.f32.gmra.mxu0 %v591
        %v720 = vpop.f32.mrf.mxu0
        %v721 = vadd.f32 %v622, %v720
        %v722 = vpop.f32.mrf.mxu0
        %723 = vmatprep.mubr.f32.mxu0 0.0
        %724 = vmatmul.mubr.f32.gmra.mxu0 %v592
        %v725 = vpop.f32.mrf.mxu0
        %v726 = vadd.f32 %v622, %v725
        %v727 = vpop.f32.mrf.mxu0
        %728 = vmatprep.mubr.f32.mxu0 0.0
        %729 = vmatmul.mubr.f32.gmra.mxu0 %v593
        %v730 = vpop.f32.mrf.mxu0
        %v731 = vadd.f32 %v622, %v730
        %v732 = vpop.f32.mrf.mxu0
        %733 = vmatprep.mubr.f32.mxu0 0.0
        %734 = vmatmul.mubr.f32.gmra.mxu0 %v594
        %v735 = vpop.f32.mrf.mxu0
        %v736 = vadd.f32 %v622, %v735
        %v737 = vpop.f32.mrf.mxu0
        %738 = vmatprep.mubr.f32.mxu0 0.0
        %739 = vmatmul.mubr.f32.gmra.mxu0 %v595
        %v740 = vpop.f32.mrf.mxu0
        %v741 = vadd.f32 %v622, %v740
        %v742 = vpop.f32.mrf.mxu0
        %743 = vmatprep.mubr.f32.mxu0 0.0
        %744 = vmatmul.mubr.f32.gmra.mxu0 %v596
        %v745 = vpop.f32.mrf.mxu0
        %v746 = vadd.f32 %v622, %v745
        %v747 = vpop.f32.mrf.mxu0
        %748 = vmatprep.mubr.f32.mxu0 0.0
        %749 = vmatmul.mubr.f32.gmra.mxu0 %v597
        %v750 = vpop.f32.mrf.mxu0
        %v751 = vadd.f32 %v622, %v750
        %v752 = vpop.f32.mrf.mxu0
        %753 = vmatprep.mubr.f32.mxu0 0.0
        %754 = vmatmul.mubr.f32.gmra.mxu0 %v598
        %v755 = vpop.f32.mrf.mxu0
        %v756 = vadd.f32 %v622, %v755
        %v757 = vpop.f32.mrf.mxu0
        %758 = vmatprep.mubr.f32.mxu0 0.0
        %759 = vmatmul.mubr.f32.gmra.mxu0 %v599
        %v760 = vpop.f32.mrf.mxu0
        %v761 = vadd.f32 %v622, %v760
        %v762 = vpop.f32.mrf.mxu0
        %763 = vmatprep.mubr.f32.mxu0 0.0
        %764 = vmatmul.mubr.f32.gmra.mxu0 %v600
        %v765 = vpop.f32.mrf.mxu0
        %v766 = vadd.f32 %v622, %v765
        %v767 = vpop.f32.mrf.mxu0
        %768 = vdwg.mxu0
        %v769 = vmax.f32 %v691, 0.0
        %v770 = vmax.f32 %v696, 0.0
        %v771 = vmax.f32 %v701, 0.0
        %v772 = vmax.f32 %v706, 0.0
        %v773 = vmax.f32 %v711, 0.0
        %v774 = vmax.f32 %v716, 0.0
        %v775 = vmax.f32 %v721, 0.0
        %v776 = vmax.f32 %v726, 0.0
        %v777 = vmax.f32 %v731, 0.0
        %v778 = vmax.f32 %v736, 0.0
        %v779 = vmax.f32 %v741, 0.0
        %v780 = vmax.f32 %v746, 0.0
        %v781 = vmax.f32 %v751, 0.0
        %v782 = vmax.f32 %v756, 0.0
        %v783 = vmax.f32 %v761, 0.0
        %v784 = vmax.f32 %v766, 0.0
        %v785 = vld [vmem:[#allocation8] sm:$0xff]
        %v786 = vld [vmem:[#allocation8 + $0x8] sm:$0xff]
        %v787 = vld [vmem:[#allocation8 + $0x10] sm:$0xff]
        %v788 = vld [vmem:[#allocation8 + $0x18] sm:$0xff]
        %v789 = vld [vmem:[#allocation8 + $0x20] sm:$0xff]
        %v790 = vld [vmem:[#allocation8 + $0x28] sm:$0xff]
        %v791 = vld [vmem:[#allocation8 + $0x30] sm:$0xff]
        %v792 = vld [vmem:[#allocation8 + $0x38] sm:$0xff]
        %v793 = vld [vmem:[#allocation8 + $0x40] sm:$0xff]
        %v794 = vld [vmem:[#allocation8 + $0x48] sm:$0xff]
        %v795 = vld [vmem:[#allocation8 + $0x50] sm:$0xff]
        %v796 = vld [vmem:[#allocation8 + $0x58] sm:$0xff]
        %v797 = vld [vmem:[#allocation8 + $0x60] sm:$0xff]
        %v798 = vld [vmem:[#allocation8 + $0x68] sm:$0xff]
        %v799 = vld [vmem:[#allocation8 + $0x70] sm:$0xff]
        %v800 = vld [vmem:[#allocation8 + $0x78] sm:$0xff]
        %v801 = vld [vmem:[#allocation8 + $0x80] sm:$0xff]
        %v802 = vld [vmem:[#allocation8 + $0x88] sm:$0xff]
        %v803 = vld [vmem:[#allocation8 + $0x90] sm:$0xff]
        %v804 = vld [vmem:[#allocation8 + $0x98] sm:$0xff]
        %v805 = vld [vmem:[#allocation8 + $0xa0] sm:$0xff]
        %v806 = vld [vmem:[#allocation8 + $0xa8] sm:$0xff]
        %v807 = vld [vmem:[#allocation8 + $0xb0] sm:$0xff]
        %v808 = vld [vmem:[#allocation8 + $0xb8] sm:$0xff]
        %v809 = vld [vmem:[#allocation8 + $0xc0] sm:$0xff]
        %v810 = vld [vmem:[#allocation8 + $0xc8] sm:$0xff]
        %v811 = vld [vmem:[#allocation8 + $0xd0] sm:$0xff]
        %v812 = vld [vmem:[#allocation8 + $0xd8] sm:$0xff]
        %v813 = vld [vmem:[#allocation8 + $0xe0] sm:$0xff]
        %v814 = vld [vmem:[#allocation8 + $0xe8] sm:$0xff]
        %v815 = vld [vmem:[#allocation8 + $0xf0] sm:$0xff]
        %v816 = vld [vmem:[#allocation8 + $0xf8] sm:$0xff]
        %v817 = vld [vmem:[%s6] sm:$0x3]
        %v819 = vlaneseq
        %v820 = vshrl.u32 %v819, 7
        %v821 = vsub.s32 0, %v820
        %v822 = vrot.slane %v817, %v821
        %v823 = vlaneseq
        %v824 = vshrl.u32 %v823, 7
        %v825 = vsub.s32 1, %v824
        %v826 = vrot.slane %v817, %v825
        %829 = vmatprep.subr.mxu0 %v816
        %830 = vmatpush1.msra.mxu0 %v815
        %831 = vmatprep.subr.mxu0 %v814
        %832 = vmatpush1.msra.mxu0 %v813
        %833 = vmatprep.subr.mxu0 %v812
        %834 = vmatpush1.msra.mxu0 %v811
        %835 = vmatprep.subr.mxu0 %v810
        %836 = vmatpush1.msra.mxu0 %v809
        %837 = vmatprep.subr.mxu0 %v808
        %838 = vmatpush1.msra.mxu0 %v807
        %839 = vmatprep.subr.mxu0 %v806
        %840 = vmatpush1.msra.mxu0 %v805
        %841 = vmatprep.subr.mxu0 %v804
        %842 = vmatpush1.msra.mxu0 %v803
        %843 = vmatprep.subr.mxu0 %v802
        %844 = vmatpush1.msra.mxu0 %v801
        %845 = vmatprep.subr.mxu0 %v800
        %846 = vmatpush1.msra.mxu0 %v799
        %847 = vmatprep.subr.mxu0 %v798
        %848 = vmatpush1.msra.mxu0 %v797
        %849 = vmatprep.subr.mxu0 %v796
        %850 = vmatpush1.msra.mxu0 %v795
        %851 = vmatprep.subr.mxu0 %v794
        %852 = vmatpush1.msra.mxu0 %v793
        %853 = vmatprep.subr.mxu0 %v792
        %854 = vmatpush1.msra.mxu0 %v791
        %855 = vmatprep.subr.mxu0 %v790
        %856 = vmatpush1.msra.mxu0 %v789
        %857 = vmatprep.subr.mxu0 %v788
        %858 = vmatpush1.msra.mxu0 %v787
        %859 = vmatprep.subr.mxu0 %v786
        %860 = vmatpush1.msra.mxu0 %v785
        %861 = vmatprep.subr.mxu0 0.0
        %862 = vmatpush2.msra.mxu0 0.0
        %863 = vmatprep.subr.mxu0 0.0
        %864 = vmatpush2.msra.mxu0 0.0
        %865 = vmatprep.subr.mxu0 0.0
        %866 = vmatpush2.msra.mxu0 0.0
        %867 = vmatprep.subr.mxu0 0.0
        %868 = vmatpush2.msra.mxu0 0.0
        %869 = vmatprep.subr.mxu0 0.0
        %870 = vmatpush2.msra.mxu0 0.0
        %871 = vmatprep.subr.mxu0 0.0
        %872 = vmatpush2.msra.mxu0 0.0
        %873 = vmatprep.subr.mxu0 0.0
        %874 = vmatpush2.msra.mxu0 0.0
        %875 = vmatprep.subr.mxu0 0.0
        %876 = vmatpush2.msra.mxu0 0.0
        %877 = vmatprep.subr.mxu0 0.0
        %878 = vmatpush2.msra.mxu0 0.0
        %879 = vmatprep.subr.mxu0 0.0
        %880 = vmatpush2.msra.mxu0 0.0
        %881 = vmatprep.subr.mxu0 0.0
        %882 = vmatpush2.msra.mxu0 0.0
        %883 = vmatprep.subr.mxu0 0.0
        %884 = vmatpush2.msra.mxu0 0.0
        %885 = vmatprep.subr.mxu0 0.0
        %886 = vmatpush2.msra.mxu0 0.0
        %887 = vmatprep.subr.mxu0 0.0
        %888 = vmatpush2.msra.mxu0 0.0
        %889 = vmatprep.subr.mxu0 0.0
        %890 = vmatpush2.msra.mxu0 0.0
        %891 = vmatprep.subr.mxu0 0.0
        %892 = vmatpush2.msra.mxu0 0.0
        %893 = vmatprep.mubr.f32.mxu0 0.0
        %894 = vmatmul.mubr.f32.gmra.mxu0 %v769
        %v895 = vpop.f32.mrf.mxu0
        %v896 = vadd.f32 %v822, %v895
        %v897 = vpop.f32.mrf.mxu0
        %v898 = vadd.f32 %v826, %v897
        %899 = vmatprep.mubr.f32.mxu0 0.0
        %900 = vmatmul.mubr.f32.gmra.mxu0 %v770
        %v901 = vpop.f32.mrf.mxu0
        %v902 = vadd.f32 %v822, %v901
        %v903 = vpop.f32.mrf.mxu0
        %v904 = vadd.f32 %v826, %v903
        %905 = vmatprep.mubr.f32.mxu0 0.0
        %906 = vmatmul.mubr.f32.gmra.mxu0 %v771
        %v907 = vpop.f32.mrf.mxu0
        %v908 = vadd.f32 %v822, %v907
        %v909 = vpop.f32.mrf.mxu0
        %v910 = vadd.f32 %v826, %v909
        %911 = vmatprep.mubr.f32.mxu0 0.0
        %912 = vmatmul.mubr.f32.gmra.mxu0 %v772
        %v913 = vpop.f32.mrf.mxu0
        %v914 = vadd.f32 %v822, %v913
        %v915 = vpop.f32.mrf.mxu0
        %v916 = vadd.f32 %v826, %v915
        %917 = vmatprep.mubr.f32.mxu0 0.0
        %918 = vmatmul.mubr.f32.gmra.mxu0 %v773
        %v919 = vpop.f32.mrf.mxu0
        %v920 = vadd.f32 %v822, %v919
        %v921 = vpop.f32.mrf.mxu0
        %v922 = vadd.f32 %v826, %v921
        %923 = vmatprep.mubr.f32.mxu0 0.0
        %924 = vmatmul.mubr.f32.gmra.mxu0 %v774
        %v925 = vpop.f32.mrf.mxu0
        %v926 = vadd.f32 %v822, %v925
        %v927 = vpop.f32.mrf.mxu0
        %v928 = vadd.f32 %v826, %v927
        %929 = vmatprep.mubr.f32.mxu0 0.0
        %930 = vmatmul.mubr.f32.gmra.mxu0 %v775
        %v931 = vpop.f32.mrf.mxu0
        %v932 = vadd.f32 %v822, %v931
        %v933 = vpop.f32.mrf.mxu0
        %v934 = vadd.f32 %v826, %v933
        %935 = vmatprep.mubr.f32.mxu0 0.0
        %936 = vmatmul.mubr.f32.gmra.mxu0 %v776
        %v937 = vpop.f32.mrf.mxu0
        %v938 = vadd.f32 %v822, %v937
        %v939 = vpop.f32.mrf.mxu0
        %v940 = vadd.f32 %v826, %v939
        %941 = vmatprep.mubr.f32.mxu0 0.0
        %942 = vmatmul.mubr.f32.gmra.mxu0 %v777
        %v943 = vpop.f32.mrf.mxu0
        %v944 = vadd.f32 %v822, %v943
        %v945 = vpop.f32.mrf.mxu0
        %v946 = vadd.f32 %v826, %v945
        %947 = vmatprep.mubr.f32.mxu0 0.0
        %948 = vmatmul.mubr.f32.gmra.mxu0 %v778
        %v949 = vpop.f32.mrf.mxu0
        %v950 = vadd.f32 %v822, %v949
        %v951 = vpop.f32.mrf.mxu0
        %v952 = vadd.f32 %v826, %v951
        %953 = vmatprep.mubr.f32.mxu0 0.0
        %954 = vmatmul.mubr.f32.gmra.mxu0 %v779
        %v955 = vpop.f32.mrf.mxu0
        %v956 = vadd.f32 %v822, %v955
        %v957 = vpop.f32.mrf.mxu0
        %v958 = vadd.f32 %v826, %v957
        %959 = vmatprep.mubr.f32.mxu0 0.0
        %960 = vmatmul.mubr.f32.gmra.mxu0 %v780
        %v961 = vpop.f32.mrf.mxu0
        %v962 = vadd.f32 %v822, %v961
        %v963 = vpop.f32.mrf.mxu0
        %v964 = vadd.f32 %v826, %v963
        %965 = vmatprep.mubr.f32.mxu0 0.0
        %966 = vmatmul.mubr.f32.gmra.mxu0 %v781
        %v967 = vpop.f32.mrf.mxu0
        %v968 = vadd.f32 %v822, %v967
        %v969 = vpop.f32.mrf.mxu0
        %v970 = vadd.f32 %v826, %v969
        %971 = vmatprep.mubr.f32.mxu0 0.0
        %972 = vmatmul.mubr.f32.gmra.mxu0 %v782
        %v973 = vpop.f32.mrf.mxu0
        %v974 = vadd.f32 %v822, %v973
        %v975 = vpop.f32.mrf.mxu0
        %v976 = vadd.f32 %v826, %v975
        %977 = vmatprep.mubr.f32.mxu0 0.0
        %978 = vmatmul.mubr.f32.gmra.mxu0 %v783
        %v979 = vpop.f32.mrf.mxu0
        %v980 = vadd.f32 %v822, %v979
        %v981 = vpop.f32.mrf.mxu0
        %v982 = vadd.f32 %v826, %v981
        %983 = vmatprep.mubr.f32.mxu0 0.0
        %984 = vmatmul.mubr.f32.gmra.mxu0 %v784
        %v985 = vpop.f32.mrf.mxu0
        %v986 = vadd.f32 %v822, %v985
        %v987 = vpop.f32.mrf.mxu0
        %v988 = vadd.f32 %v826, %v987
        %989 = vdwg.mxu0
        %v990 = vtanh.pop %v896
        %v991 = vtanh.pop %v902
        %v992 = vtanh.pop %v908
        %v993 = vtanh.pop %v914
        %v994 = vtanh.pop %v920
        %v995 = vtanh.pop %v926
        %v996 = vtanh.pop %v932
        %v997 = vtanh.pop %v938
        %v998 = vtanh.pop %v944
        %v999 = vtanh.pop %v950
        %v1000 = vtanh.pop %v956
        %v1001 = vtanh.pop %v962
        %v1002 = vtanh.pop %v968
        %v1003 = vtanh.pop %v974
        %v1004 = vtanh.pop %v980
        %v1005 = vtanh.pop %v986
        %v1006 = vmul.f32 %v990, 1.442695
        %v1007 = vpow.pop %v1006
        %v1008 = vmul.f32 %v991, 1.442695
        %v1009 = vpow.pop %v1008
        %v1010 = vmul.f32 %v992, 1.442695
        %v1011 = vpow.pop %v1010
        %v1012 = vmul.f32 %v993, 1.442695
        %v1013 = vpow.pop %v1012
        %v1014 = vmul.f32 %v994, 1.442695
        %v1015 = vpow.pop %v1014
        %v1016 = vmul.f32 %v995, 1.442695
        %v1017 = vpow.pop %v1016
        %v1018 = vmul.f32 %v996, 1.442695
        %v1019 = vpow.pop %v1018
        %v1020 = vmul.f32 %v997, 1.442695
        %v1021 = vpow.pop %v1020
        %v1022 = vmul.f32 %v998, 1.442695
        %v1023 = vpow.pop %v1022
        %v1024 = vmul.f32 %v999, 1.442695
        %v1025 = vpow.pop %v1024
        %v1026 = vmul.f32 %v1000, 1.442695
        %v1027 = vpow.pop %v1026
        %v1028 = vmul.f32 %v1001, 1.442695
        %v1029 = vpow.pop %v1028
        %v1030 = vmul.f32 %v1002, 1.442695
        %v1031 = vpow.pop %v1030
        %v1032 = vmul.f32 %v1003, 1.442695
        %v1033 = vpow.pop %v1032
        %v1034 = vmul.f32 %v1004, 1.442695
        %v1035 = vpow.pop %v1034
        %v1036 = vmul.f32 %v1005, 1.442695
        %v1037 = vpow.pop %v1036
        %v1038 = vmul.f32 %v401, %v1007
        %v1039 = vmul.f32 %v402, %v1009
        %v1040 = vmul.f32 %v403, %v1011
        %v1041 = vmul.f32 %v404, %v1013
        %v1042 = vmul.f32 %v405, %v1015
        %v1043 = vmul.f32 %v406, %v1017
        %v1044 = vmul.f32 %v407, %v1019
        %v1045 = vmul.f32 %v408, %v1021
        %v1046 = vmul.f32 %v409, %v1023
        %v1047 = vmul.f32 %v410, %v1025
        %v1048 = vmul.f32 %v411, %v1027
        %v1049 = vmul.f32 %v412, %v1029
        %v1050 = vmul.f32 %v413, %v1031
        %v1051 = vmul.f32 %v414, %v1033
        %v1052 = vmul.f32 %v415, %v1035
        %v1053 = vmul.f32 %v416, %v1037
        %v1054 = vadd.f32 %v1038, %v898
        %v1055 = vadd.f32 %v1039, %v904
        %v1056 = vadd.f32 %v1040, %v910
        %v1057 = vadd.f32 %v1041, %v916
        %v1058 = vadd.f32 %v1042, %v922
        %v1059 = vadd.f32 %v1043, %v928
        %v1060 = vadd.f32 %v1044, %v934
        %v1061 = vadd.f32 %v1045, %v940
        %v1062 = vadd.f32 %v1046, %v946
        %v1063 = vadd.f32 %v1047, %v952
        %v1064 = vadd.f32 %v1048, %v958
        %v1065 = vadd.f32 %v1049, %v964
        %v1066 = vadd.f32 %v1050, %v970
        %v1067 = vadd.f32 %v1051, %v976
        %v1068 = vadd.f32 %v1052, %v982
        %v1069 = vadd.f32 %v1053, %v988
        %1070 = vst [vmem:[%s369] sm:$0xff] %v1054
        %1071 = vst [vmem:[%s369 + $0x10] sm:$0xff] %v1055
        %1072 = vst [vmem:[%s369 + $0x20] sm:$0xff] %v1056
        %1073 = vst [vmem:[%s369 + $0x30] sm:$0xff] %v1057
        %1074 = vst [vmem:[%s369 + $0x40] sm:$0xff] %v1058
        %1075 = vst [vmem:[%s369 + $0x50] sm:$0xff] %v1059
        %1076 = vst [vmem:[%s369 + $0x60] sm:$0xff] %v1060
        %1077 = vst [vmem:[%s369 + $0x70] sm:$0xff] %v1061
        %1078 = vst [vmem:[%s369 + $0x80] sm:$0xff] %v1062
        %1079 = vst [vmem:[%s369 + $0x90] sm:$0xff] %v1063
        %1080 = vst [vmem:[%s369 + $0xa0] sm:$0xff] %v1064
        %1081 = vst [vmem:[%s369 + $0xb0] sm:$0xff] %v1065
        %1082 = vst [vmem:[%s369 + $0xc0] sm:$0xff] %v1066
        %1083 = vst [vmem:[%s369 + $0xd0] sm:$0xff] %v1067
        %1084 = vst [vmem:[%s369 + $0xe0] sm:$0xff] %v1068
        %1085 = vst [vmem:[%s369 + $0xf0] sm:$0xff] %v1069
        %1086 = vst [vmem:[%s369 + $0x8] sm:$0xff] %v385
        %1087 = vst [vmem:[%s369 + $0x18] sm:$0xff] %v386
        %1088 = vst [vmem:[%s369 + $0x28] sm:$0xff] %v387
        %1089 = vst [vmem:[%s369 + $0x38] sm:$0xff] %v388
        %1090 = vst [vmem:[%s369 + $0x48] sm:$0xff] %v389
        %1091 = vst [vmem:[%s369 + $0x58] sm:$0xff] %v390
        %1092 = vst [vmem:[%s369 + $0x68] sm:$0xff] %v391
        %1093 = vst [vmem:[%s369 + $0x78] sm:$0xff] %v392
        %1094 = vst [vmem:[%s369 + $0x88] sm:$0xff] %v393
        %1095 = vst [vmem:[%s369 + $0x98] sm:$0xff] %v394
        %1096 = vst [vmem:[%s369 + $0xa8] sm:$0xff] %v395
        %1097 = vst [vmem:[%s369 + $0xb8] sm:$0xff] %v396
        %1098 = vst [vmem:[%s369 + $0xc8] sm:$0xff] %v397
        %1099 = vst [vmem:[%s369 + $0xd8] sm:$0xff] %v398
        %1100 = vst [vmem:[%s369 + $0xe8] sm:$0xff] %v399
        %1101 = vst [vmem:[%s369 + $0xf8] sm:$0xff] %v400
        %1102 = vadd.xlane.f32.xlu0 %v990
        %v1103 = vpop.xlane.xlu0 %1102
        %1104 = vadd.xlane.f32.xlu0 %v991
        %v1105 = vpop.xlane.xlu0 %1104
        %1106 = vadd.xlane.f32.xlu0 %v992
        %v1107 = vpop.xlane.xlu0 %1106
        %1108 = vadd.xlane.f32.xlu0 %v993
        %v1109 = vpop.xlane.xlu0 %1108
        %1110 = vadd.xlane.f32.xlu0 %v994
        %v1111 = vpop.xlane.xlu0 %1110
        %1112 = vadd.xlane.f32.xlu0 %v995
        %v1113 = vpop.xlane.xlu0 %1112
        %1114 = vadd.xlane.f32.xlu0 %v996
        %v1115 = vpop.xlane.xlu0 %1114
        %1116 = vadd.xlane.f32.xlu0 %v997
        %v1117 = vpop.xlane.xlu0 %1116
        %1118 = vadd.xlane.f32.xlu0 %v998
        %v1119 = vpop.xlane.xlu0 %1118
        %1120 = vadd.xlane.f32.xlu0 %v999
        %v1121 = vpop.xlane.xlu0 %1120
        %1122 = vadd.xlane.f32.xlu0 %v1000
        %v1123 = vpop.xlane.xlu0 %1122
        %1124 = vadd.xlane.f32.xlu0 %v1001
        %v1125 = vpop.xlane.xlu0 %1124
        %1126 = vadd.xlane.f32.xlu0 %v1002
        %v1127 = vpop.xlane.xlu0 %1126
        %1128 = vadd.xlane.f32.xlu0 %v1003
        %v1129 = vpop.xlane.xlu0 %1128
        %1130 = vadd.xlane.f32.xlu0 %v1004
        %v1131 = vpop.xlane.xlu0 %1130
        %1132 = vadd.xlane.f32.xlu0 %v1005
        %v1133 = vpop.xlane.xlu0 %1132
        %vm1134 = vcmask 7168
        %1135 = vst.msk [vmem:[%s383] sm:$0xff] %vm1134, %v1103
        %1136 = vst.msk [vmem:[%s383 + $0x8] sm:$0xff] %vm1134, %v1105
        %1137 = vst.msk [vmem:[%s383 + $0x10] sm:$0xff] %vm1134, %v1107
        %1138 = vst.msk [vmem:[%s383 + $0x18] sm:$0xff] %vm1134, %v1109
        %1139 = vst.msk [vmem:[%s383 + $0x20] sm:$0xff] %vm1134, %v1111
        %1140 = vst.msk [vmem:[%s383 + $0x28] sm:$0xff] %vm1134, %v1113
        %1141 = vst.msk [vmem:[%s383 + $0x30] sm:$0xff] %vm1134, %v1115
        %1142 = vst.msk [vmem:[%s383 + $0x38] sm:$0xff] %vm1134, %v1117
        %1143 = vst.msk [vmem:[%s383 + $0x40] sm:$0xff] %vm1134, %v1119
        %1144 = vst.msk [vmem:[%s383 + $0x48] sm:$0xff] %vm1134, %v1121
        %1145 = vst.msk [vmem:[%s383 + $0x50] sm:$0xff] %vm1134, %v1123
        %1146 = vst.msk [vmem:[%s383 + $0x58] sm:$0xff] %vm1134, %v1125
        %1147 = vst.msk [vmem:[%s383 + $0x60] sm:$0xff] %vm1134, %v1127
        %1148 = vst.msk [vmem:[%s383 + $0x68] sm:$0xff] %vm1134, %v1129
        %1149 = vst.msk [vmem:[%s383 + $0x70] sm:$0xff] %vm1134, %v1131
        %1150 = vst.msk [vmem:[%s383 + $0x78] sm:$0xff] %vm1134, %v1133
        %s1151 = sand.u32 %s188, 1
        %s1152 = scalar_lea.sflag [#allocation4], %s1151
        %s1153 = sand.u32 %s188, 1
        %s1154 = smul.addr %s1153, 256
        %s1155 = scalar_lea.vmem [#allocation10], %s1154
        %s1156 = smul.u32 16, %s28
        %p1157 = scmp.lt.s32.totalorder %s1156, 63
        %s1158 = scalar_select %p1157, %s1156, 63
        %s1159 = smul.addr %s1158, 8
        %s1160 = scalar_lea.vmem %s8, %s1159
        // Predicated region
        $region65: #{tpu_custom_call.1} parent=47 // pred_check
          %p1161 = pneg %p198
        $region66: #{tpu_custom_call.1} parent=47 // pred_check_branch
          %1163 = sbr.rel (%p1161) target = $region68
        $region67: #{tpu_custom_call.1} parent=47 // pred_region
          %s1164 = smul.u32 16, %s28
          %s1166 = ssub.s32 4096, 4096
          %1167 = vsyncadd %s1152, %s1166
          %s1168 = smul.addr %s1164, 2
          %s1169 = smul.addr %s1168, 128
          %s1170 = scalar_lea.hbm %s7, %s1169
          %s1171 = sshll.u32 %s1155, 4
          %s1172 = int_to_ptr.vmem [resolvable:$true] %s1171
          %1177 = dma.vmem_to_hbm [thread:$0]  %s1172, 4096, %s1170, %s1152, 256, 256, 16
        $region68: #{tpu_custom_call.1} parent=47 // pred_fallthru
          _
        // Predicated region
        $region69: #{tpu_custom_call.1} parent=47 // pred_check
          %p1178 = pneg %p224
        $region70: #{tpu_custom_call.1} parent=47 // pred_check_branch
          %1180 = sbr.rel (%p1178) target = $region72
        $region71: #{tpu_custom_call.1} parent=47 // pred_region
          %s1181 = smul.u32 16, %s28
        $region72: #{tpu_custom_call.1} parent=47 // pred_fallthru
          _
      $region48: #{tpu_custom_call.1} parent=5 // pred_fallthru
        _
      %p1182 = scmp.le.s32.totalorder 2, %s23
      // Predicated region
      $region73: #{tpu_custom_call.1} parent=5 // pred_check
        %p1183 = pneg %p1182
      $region74: #{tpu_custom_call.1} parent=5 // pred_check_branch
        %1185 = sbr.rel (%p1183) target = $region76
      $region75: #{tpu_custom_call.1} parent=5 // pred_region
        %s1186 = ssub.s32 %s23, 2
        // Predicated region
        $region77: #{tpu_custom_call.1} parent=75 // pred_check
          %p1187 = pneg %p204
        $region78: #{tpu_custom_call.1} parent=75 // pred_check_branch
          %1189 = sbr.rel (%p1187) target = $region80
        $region79: #{tpu_custom_call.1} parent=75 // pred_region
          %s1190 = sand.u32 %s189, 1
          %s1191 = scalar_lea.sflag [#allocation4], %s1190
          %s1192 = sand.u32 %s189, 1
          %s1193 = smul.addr %s1192, 256
          %s1194 = scalar_lea.vmem [#allocation10], %s1193
          %1195 = dma.done %s1191, 4096
        $region80: #{tpu_custom_call.1} parent=75 // pred_fallthru
          _
        // Predicated region
        $region81: #{tpu_custom_call.1} parent=75 // pred_check
          %p1196 = pneg %p230
        $region82: #{tpu_custom_call.1} parent=75 // pred_check_branch
          %1198 = sbr.rel (%p1196) target = $region84
        $region83: #{tpu_custom_call.1} parent=75 // pred_region
          %s1199 = smul.u32 16, %s29
          %p1200 = scmp.lt.s32.totalorder %s1199, 63
          %s1201 = scalar_select %p1200, %s1199, 63
          %s1202 = smul.addr %s1201, 8
          %s1203 = scalar_lea.vmem %s8, %s1202
        $region84: #{tpu_custom_call.1} parent=75 // pred_fallthru
          _
      $region76: #{tpu_custom_call.1} parent=5 // pred_fallthru
        _
    $region6: #{tpu_custom_call.1} parent=1 // loop_footer
      %s27 = sadd.s32 1, %s23
    $region7: #{tpu_custom_call.1} parent=1 // loop_footer_branch
      %22 = sbr.rel target = $region3
    $region8: #{tpu_custom_call.1} parent=1 // loop_exit
      _
    %1204 = vsyncpa [#allocation3], 1
    %s1205 = scalar_lea.sflag [#allocation3], 1
    %1206 = vsyncpa %s1205, 1
    %1207 = vsyncpa [#allocation6], 1
    %1208 = vsyncpa [#allocation9], 1
    %1209 = vsyncpa [#allocation4], 1
    %s1210 = scalar_lea.sflag [#allocation4], 1
    %1211 = vsyncpa %s1210, 1

</llo_original>
